<compile_context>
chip_gen: v7x
topology: tpu7x:2x2x1
jax: 0.10.0
libtpu: 0.0.40
codegen_flags: <defaults>
</compile_context>

<pallas_src>
import functools

import jax
import jax.numpy as jnp
from jax.experimental import pallas as pl
from jax.experimental.pallas import tpu as pltpu

_LANES = 128                      # TPU vreg lane width
_MAX_C_BLK = 512                  # max channel rows per grid block (128-multiple)
_C_SUB = 64                       # channel rows kept live while accumulating
_TARGET_TILE_BYTES = 2 << 20      # ~2 MiB per input per grid step
_VMEM_LIMIT = 48 * 1024 * 1024    # stays well under v7x's 64 MiB physical VMEM


def _accum_tile(x1_ref, x2_ref, acc1_ref, acc2_ref, valid):
    """Accumulate lane-partial sums of the current (TILE_N, C_BLK, TILE_S) tile.

    `valid` (static int) = number of in-bounds S elements in this tile.  Chunks
    entirely past `valid` are skipped (never loaded); the straddling chunk is
    masked, since the HBM block may overrun the array and its tail is undefined.
    """
    tile_n, c_blk, tile_s = x1_ref.shape
    n_chunks = tile_s // _LANES
    for nb in range(tile_n):
        for cb in range(0, c_blk, _C_SUB):
            cs = min(_C_SUB, c_blk - cb)
            p1 = acc1_ref[nb:nb + 1, cb:cb + cs, :]
            p2 = acc2_ref[nb:nb + 1, cb:cb + cs, :]
            for j in range(n_chunks):
                lo = j * _LANES
                if lo >= valid:            # fully OOB chunk: skip the load entirely
                    break
                a = x1_ref[nb:nb + 1, cb:cb + cs, lo:lo + _LANES].astype(jnp.float32)
                b = x2_ref[nb:nb + 1, cb:cb + cs, lo:lo + _LANES].astype(jnp.float32)
                if lo + _LANES > valid:    # straddling chunk: mask invalid lanes
                    lane = jax.lax.broadcasted_iota(jnp.int32, a.shape, dimension=2)
                    keep = lane < (valid - lo)
                    a = jnp.where(keep, a, 0.0)
                    b = jnp.where(keep, b, 0.0)
                p1 = p1 + a
                p2 = p2 + b
            acc1_ref[nb:nb + 1, cb:cb + cs, :] = p1
            acc2_ref[nb:nb + 1, cb:cb + cs, :] = p2


def _stca_pool_kernel(x1_ref, x2_ref, out_ref, acc1_ref, acc2_ref, *, s_total):
    tile_n, c_blk, tile_s = x1_ref.shape
    num_s_tiles = -(-s_total // tile_s)                    # static
    tail_valid = s_total - (num_s_tiles - 1) * tile_s      # static, in (0, tile_s]
    s_step = pl.program_id(2)

    @pl.when(s_step == 0)
    def _init():
        acc1_ref[...] = jnp.zeros_like(acc1_ref)
        acc2_ref[...] = jnp.zeros_like(acc2_ref)

    # Streaming phase: per-chunk load + upcast, lane-partial VPU adds.
    if num_s_tiles == 1:
        _accum_tile(x1_ref, x2_ref, acc1_ref, acc2_ref, tail_valid)
    elif tail_valid == tile_s:
        _accum_tile(x1_ref, x2_ref, acc1_ref, acc2_ref, tile_s)
    else:
        @pl.when(s_step < num_s_tiles - 1)
        def _full():
            _accum_tile(x1_ref, x2_ref, acc1_ref, acc2_ref, tile_s)

        @pl.when(s_step == num_s_tiles - 1)
        def _tail():
            _accum_tile(x1_ref, x2_ref, acc1_ref, acc2_ref, tail_valid)

    # Finalize: one cross-lane (XLU) reduce per channel sub-block, store the sums.
    @pl.when(s_step == num_s_tiles - 1)
    def _finalize():
        for nb in range(tile_n):
            for cb in range(0, c_blk, _C_SUB):
                cs = min(_C_SUB, c_blk - cb)
                out_ref[nb:nb + 1, 0, cb:cb + cs] = jnp.sum(
                    acc1_ref[nb:nb + 1, cb:cb + cs, :], axis=-1)
                out_ref[nb:nb + 1, 1, cb:cb + cs] = jnp.sum(
                    acc2_ref[nb:nb + 1, cb:cb + cs, :], axis=-1)


def _choose_tiles(N, C, S, itemsize):
    # Channel block: keep full C unless it is large and splits into 128-multiples
    # (the lane dim of the (TILE_N, 2, C_BLK) output block must be 128-aligned or
    # equal to C).  Splitting C also gives v7x a second parallel grid axis and
    # bounds accumulator size.
    c_blk = C
    if C > _MAX_C_BLK and C % _LANES == 0:
        for cand in range(_MAX_C_BLK, _LANES - 1, -_LANES):
            if C % cand == 0:
                c_blk = cand
                break

    # S tile sized by bytes so per-step DMA hides the per-grid-step overhead.
    s_ceil = pl.cdiv(S, _LANES) * _LANES
    tile_s = (_TARGET_TILE_BYTES // (c_blk * itemsize)) // _LANES * _LANES
    tile_s = int(min(max(_LANES, tile_s), s_ceil))
    num_s_tiles = int(pl.cdiv(S, tile_s))

    # If all of S fits in one tile and the step is still small, fold batch rows
    # into the block so each grid step still moves MiB-scale data.
    tile_n = 1
    if num_s_tiles == 1:
        step_bytes = c_blk * tile_s * itemsize
        for d in range(N, 0, -1):
            if N % d == 0 and d * step_bytes <= _TARGET_TILE_BYTES:
                tile_n = d
                break
    return tile_n, c_blk, tile_s, num_s_tiles


def stca_pallas(x1, x2, ws1, ws2, wt1, wt2, aw, ab):
    """x1, x2: (N, C, T, W, H).  Returns attention of shape (N, C, 2, 1, 1, 1)."""
    N, C, T, W, H = x1.shape
    S = T * W * H
    itemsize = jnp.dtype(x1.dtype).itemsize

    x1f = x1.reshape(N, C, S)      # free reshape, no padding / extra HBM traffic
    x2f = x2.reshape(N, C, S)

    tile_n, c_blk, tile_s, num_s_tiles = _choose_tiles(N, C, S, itemsize)
    kernel = functools.partial(_stca_pool_kernel, s_total=S)

    cost = pl.CostEstimate(
        flops=int(2 * N * C * S),
        transcendentals=0,
        bytes_accessed=int(2 * N * C * S * itemsize + 2 * N * C * 4),
    )

    sums = pl.pallas_call(
        kernel,
        out_shape=jax.ShapeDtypeStruct((N, 2, C), jnp.float32),
        grid_spec=pltpu.PrefetchScalarGridSpec(
            num_scalar_prefetch=0,
            grid=(N // tile_n, C // c_blk, num_s_tiles),
            in_specs=[
                pl.BlockSpec((tile_n, c_blk, tile_s), lambda n, c, s: (n, c, s)),
                pl.BlockSpec((tile_n, c_blk, tile_s), lambda n, c, s: (n, c, s)),
            ],
            out_specs=pl.BlockSpec((tile_n, 2, c_blk), lambda n, c, s: (n, 0, c)),
            scratch_shapes=[
                pltpu.VMEM((tile_n, c_blk, _LANES), jnp.float32),
                pltpu.VMEM((tile_n, c_blk, _LANES), jnp.float32),
            ],
        ),
        compiler_params=pltpu.CompilerParams(
            dimension_semantics=("parallel", "parallel", "arbitrary"),
            vmem_limit_bytes=_VMEM_LIMIT,
        ),
        cost_estimate=cost,
    )(x1f, x2f)

    # Tiny epilogue in XLA (per perf review): 1/S mean scale, the two low-rank
    # channel FCs, the afc affine and the 2-way softmax act on a few KB of data.
    hp = jax.lax.Precision.HIGHEST
    inv_s = jnp.float32(1.0 / S)
    avg1 = sums[:, 0, :] * inv_s
    avg2 = sums[:, 1, :] * inv_s
    s_out = jnp.dot(jnp.dot(avg1, ws1.T.astype(jnp.float32), precision=hp),
                    ws2.T.astype(jnp.float32), precision=hp)
    t_out = jnp.dot(jnp.dot(avg2, wt1.T.astype(jnp.float32), precision=hp),
                    wt2.T.astype(jnp.float32), precision=hp)
    att = jnp.stack([s_out, t_out], axis=-1).reshape(N * C, 2)
    y = jnp.dot(att, aw.astype(jnp.float32).T, precision=hp) + ab.astype(jnp.float32)
    p = jax.nn.softmax(y, axis=-1)
    return p.reshape(N, C, 2, 1, 1, 1)


def stca_ref(x1, x2, ws1, ws2, wt1, wt2, aw, ab):
    """Pure-JAX reference matching the PyTorch forward."""
    hp = jax.lax.Precision.HIGHEST
    N, C = x1.shape[:2]
    x1 = x1.astype(jnp.float32)
    x2 = x2.astype(jnp.float32)
    avg1 = jnp.mean(x1, axis=(2, 3, 4))
    avg2 = jnp.mean(x2, axis=(2, 3, 4))
    s_out = jnp.dot(jnp.dot(avg1, ws1.T, precision=hp), ws2.T, precision=hp)
    t_out = jnp.dot(jnp.dot(avg2, wt1.T, precision=hp), wt2.T, precision=hp)
    att = jnp.stack([s_out, t_out], axis=-1).reshape(N * C, 2)
    y = jnp.dot(att, aw.T, precision=hp) + ab
    p = jax.nn.softmax(y, axis=-1)
    return p.reshape(N, C, 2, 1, 1, 1)


if __name__ == "__main__":
    ratio = 16

    def _run_case(N, C, T, W, H):
        mid = max(1, C // ratio)
        key = jax.random.PRNGKey(0)
        k = jax.random.split(key, 8)
        x1 = jax.random.normal(k[0], (N, C, T, W, H), dtype=jnp.float32)
        x2 = jax.random.normal(k[1], (N, C, T, W, H), dtype=jnp.float32)

        # Deterministic parameter init (shapes from the module __init__; synthetic)
        ws1 = jax.random.normal(k[2], (mid, C), dtype=jnp.float32) * 0.1   # Sfc1
        ws2 = jax.random.normal(k[3], (C, mid), dtype=jnp.float32) * 0.1   # Sfc2
        wt1 = jax.random.normal(k[4], (mid, C), dtype=jnp.float32) * 0.1   # Tfc1
        wt2 = jax.random.normal(k[5], (C, mid), dtype=jnp.float32) * 0.1   # Tfc2
        aw = jax.random.normal(k[6], (2, 2), dtype=jnp.float32) * 0.5      # afc weight
        ab = jax.random.normal(k[7], (2,), dtype=jnp.float32) * 0.1        # afc bias

        out = jax.block_until_ready(stca_pallas(x1, x2, ws1, ws2, wt1, wt2, aw, ab))
        ref = stca_ref(x1, x2, ws1, ws2, wt1, wt2, aw, ab)
        assert out.shape == (N, C, 2, 1, 1, 1)
        assert jnp.allclose(out, ref, atol=1e-5, rtol=1e-5), (
            f"mismatch vs pure-JAX reference for N={N} C={C} T={T} W={W} H={H}")

    # Single S-tile, batch rows folded into the block (TILE_N=2).
    _run_case(N=2, C=32, T=4, W=32, H=32)
    # Ragged S (105, not a multiple of 128): exercises the in-kernel tail mask.
    _run_case(N=2, C=32, T=3, W=5, H=7)
    # Large C (channel-split grid axis), multi-tile S with a ragged tail.
    _run_case(N=2, C=1024, T=3, W=33, H=33)

    print("KERNEL_OK")
</pallas_src>

<mosaic_0001>
module attributes {stable_mosaic.version = 11 : i64} {
  func.func @_stca_pool_kernel(%arg0: i32, %arg1: i32, %arg2: i32, %arg3: memref<2x32x4096xf32, #tpu.memory_space<vmem>>, %arg4: memref<2x32x4096xf32, #tpu.memory_space<vmem>>, %arg5: memref<2x2x32xf32, #tpu.memory_space<vmem>>, %arg6: memref<2x32x128xf32, #tpu.memory_space<vmem>>, %arg7: memref<2x32x128xf32, #tpu.memory_space<vmem>>) attributes {dimension_semantics = [#tpu.dimension_semantics<parallel>, #tpu.dimension_semantics<parallel>, #tpu.dimension_semantics<arbitrary>], iteration_bounds = array<i64: 1, 1, 1>, scalar_prefetch = 0 : i64, scratch_operands = 2 : i64, tpu.core_type = #tpu.core_type<tc>, window_params = [{transform_indices = @transform_0, window_bounds = array<i64: 2, 32, 4096>}, {transform_indices = @transform_1, window_bounds = array<i64: 2, 32, 4096>}, {transform_indices = @transform_2, window_bounds = array<i64: 2, 2, 32>}]} {
    %c0_i32 = arith.constant 0 : i32
    %0 = arith.cmpi eq, %arg2, %c0_i32 : i32
    %1 = arith.extui %0 : i1 to i32
    %c0_i32_0 = arith.constant 0 : i32
    %2 = arith.cmpi ne, %1, %c0_i32_0 : i32
    scf.if %2 {
      %cst = arith.constant 0.000000e+00 : f32
      %270 = vector.broadcast %cst : f32 to vector<2x32x128xf32>
      %c0_378 = arith.constant 0 : index
      %c0_379 = arith.constant 0 : index
      %c0_380 = arith.constant 0 : index
      %271 = vector.load %arg6[%c0_378, %c0_379, %c0_380] : memref<2x32x128xf32, #tpu.memory_space<vmem>>, vector<2x32x128xf32>
      tpu.vector_store %arg6[%c0_378, %c0_379, %c0_380], %270 {strides = array<i32>} : memref<2x32x128xf32, #tpu.memory_space<vmem>>, vector<2x32x128xf32>,
      %cst_381 = arith.constant 0.000000e+00 : f32
      %272 = vector.broadcast %cst_381 : f32 to vector<2x32x128xf32>
      %c0_382 = arith.constant 0 : index
      %c0_383 = arith.constant 0 : index
      %c0_384 = arith.constant 0 : index
      %273 = vector.load %arg7[%c0_382, %c0_383, %c0_384] : memref<2x32x128xf32, #tpu.memory_space<vmem>>, vector<2x32x128xf32>
      tpu.vector_store %arg7[%c0_382, %c0_383, %c0_384], %272 {strides = array<i32>} : memref<2x32x128xf32, #tpu.memory_space<vmem>>, vector<2x32x128xf32>,
    } else {
    }
    %c0 = arith.constant 0 : index
    %c0_1 = arith.constant 0 : index
    %c0_2 = arith.constant 0 : index
    %3 = vector.load %arg6[%c0, %c0_1, %c0_2] : memref<2x32x128xf32, #tpu.memory_space<vmem>>, vector<1x32x128xf32>
    %c0_3 = arith.constant 0 : index
    %c0_4 = arith.constant 0 : index
    %c0_5 = arith.constant 0 : index
    %4 = vector.load %arg7[%c0_3, %c0_4, %c0_5] : memref<2x32x128xf32, #tpu.memory_space<vmem>>, vector<1x32x128xf32>
    %c0_6 = arith.constant 0 : index
    %c0_7 = arith.constant 0 : index
    %c0_8 = arith.constant 0 : index
    %5 = vector.load %arg3[%c0_6, %c0_7, %c0_8] : memref<2x32x4096xf32, #tpu.memory_space<vmem>>, vector<1x32x128xf32>
    %c0_9 = arith.constant 0 : index
    %c0_10 = arith.constant 0 : index
    %c0_11 = arith.constant 0 : index
    %6 = vector.load %arg4[%c0_9, %c0_10, %c0_11] : memref<2x32x4096xf32, #tpu.memory_space<vmem>>, vector<1x32x128xf32>
    %7 = arith.addf %3, %5 : vector<1x32x128xf32>
    %8 = arith.addf %4, %6 : vector<1x32x128xf32>
    %c0_12 = arith.constant 0 : index
    %c0_13 = arith.constant 0 : index
    %c128 = arith.constant 128 : index
    %9 = vector.load %arg3[%c0_12, %c0_13, %c128] : memref<2x32x4096xf32, #tpu.memory_space<vmem>>, vector<1x32x128xf32>
    %c0_14 = arith.constant 0 : index
    %c0_15 = arith.constant 0 : index
    %c128_16 = arith.constant 128 : index
    %10 = vector.load %arg4[%c0_14, %c0_15, %c128_16] : memref<2x32x4096xf32, #tpu.memory_space<vmem>>, vector<1x32x128xf32>
    %11 = arith.addf %7, %9 : vector<1x32x128xf32>
    %12 = arith.addf %8, %10 : vector<1x32x128xf32>
    %c0_17 = arith.constant 0 : index
    %c0_18 = arith.constant 0 : index
    %c256 = arith.constant 256 : index
    %13 = vector.load %arg3[%c0_17, %c0_18, %c256] : memref<2x32x4096xf32, #tpu.memory_space<vmem>>, vector<1x32x128xf32>
    %c0_19 = arith.constant 0 : index
    %c0_20 = arith.constant 0 : index
    %c256_21 = arith.constant 256 : index
    %14 = vector.load %arg4[%c0_19, %c0_20, %c256_21] : memref<2x32x4096xf32, #tpu.memory_space<vmem>>, vector<1x32x128xf32>
    %15 = arith.addf %11, %13 : vector<1x32x128xf32>
    %16 = arith.addf %12, %14 : vector<1x32x128xf32>
    %c0_22 = arith.constant 0 : index
    %c0_23 = arith.constant 0 : index
    %c384 = arith.constant 384 : index
    %17 = vector.load %arg3[%c0_22, %c0_23, %c384] : memref<2x32x4096xf32, #tpu.memory_space<vmem>>, vector<1x32x128xf32>
    %c0_24 = arith.constant 0 : index
    %c0_25 = arith.constant 0 : index
    %c384_26 = arith.constant 384 : index
    %18 = vector.load %arg4[%c0_24, %c0_25, %c384_26] : memref<2x32x4096xf32, #tpu.memory_space<vmem>>, vector<1x32x128xf32>
    %19 = arith.addf %15, %17 : vector<1x32x128xf32>
    %20 = arith.addf %16, %18 : vector<1x32x128xf32>
    %c0_27 = arith.constant 0 : index
    %c0_28 = arith.constant 0 : index
    %c512 = arith.constant 512 : index
    %21 = vector.load %arg3[%c0_27, %c0_28, %c512] : memref<2x32x4096xf32, #tpu.memory_space<vmem>>, vector<1x32x128xf32>
    %c0_29 = arith.constant 0 : index
    %c0_30 = arith.constant 0 : index
    %c512_31 = arith.constant 512 : index
    %22 = vector.load %arg4[%c0_29, %c0_30, %c512_31] : memref<2x32x4096xf32, #tpu.memory_space<vmem>>, vector<1x32x128xf32>
    %23 = arith.addf %19, %21 : vector<1x32x128xf32>
    %24 = arith.addf %20, %22 : vector<1x32x128xf32>
    %c0_32 = arith.constant 0 : index
    %c0_33 = arith.constant 0 : index
    %c640 = arith.constant 640 : index
    %25 = vector.load %arg3[%c0_32, %c0_33, %c640] : memref<2x32x4096xf32, #tpu.memory_space<vmem>>, vector<1x32x128xf32>
    %c0_34 = arith.constant 0 : index
    %c0_35 = arith.constant 0 : index
    %c640_36 = arith.constant 640 : index
    %26 = vector.load %arg4[%c0_34, %c0_35, %c640_36] : memref<2x32x4096xf32, #tpu.memory_space<vmem>>, vector<1x32x128xf32>
    %27 = arith.addf %23, %25 : vector<1x32x128xf32>
    %28 = arith.addf %24, %26 : vector<1x32x128xf32>
    %c0_37 = arith.constant 0 : index
    %c0_38 = arith.constant 0 : index
    %c768 = arith.constant 768 : index
    %29 = vector.load %arg3[%c0_37, %c0_38, %c768] : memref<2x32x4096xf32, #tpu.memory_space<vmem>>, vector<1x32x128xf32>
    %c0_39 = arith.constant 0 : index
    %c0_40 = arith.constant 0 : index
    %c768_41 = arith.constant 768 : index
    %30 = vector.load %arg4[%c0_39, %c0_40, %c768_41] : memref<2x32x4096xf32, #tpu.memory_space<vmem>>, vector<1x32x128xf32>
    %31 = arith.addf %27, %29 : vector<1x32x128xf32>
    %32 = arith.addf %28, %30 : vector<1x32x128xf32>
    %c0_42 = arith.constant 0 : index
    %c0_43 = arith.constant 0 : index
    %c896 = arith.constant 896 : index
    %33 = vector.load %arg3[%c0_42, %c0_43, %c896] : memref<2x32x4096xf32, #tpu.memory_space<vmem>>, vector<1x32x128xf32>
    %c0_44 = arith.constant 0 : index
    %c0_45 = arith.constant 0 : index
    %c896_46 = arith.constant 896 : index
    %34 = vector.load %arg4[%c0_44, %c0_45, %c896_46] : memref<2x32x4096xf32, #tpu.memory_space<vmem>>, vector<1x32x128xf32>
    %35 = arith.addf %31, %33 : vector<1x32x128xf32>
    %36 = arith.addf %32, %34 : vector<1x32x128xf32>
    %c0_47 = arith.constant 0 : index
    %c0_48 = arith.constant 0 : index
    %c1024 = arith.constant 1024 : index
    %37 = vector.load %arg3[%c0_47, %c0_48, %c1024] : memref<2x32x4096xf32, #tpu.memory_space<vmem>>, vector<1x32x128xf32>
    %c0_49 = arith.constant 0 : index
    %c0_50 = arith.constant 0 : index
    %c1024_51 = arith.constant 1024 : index
    %38 = vector.load %arg4[%c0_49, %c0_50, %c1024_51] : memref<2x32x4096xf32, #tpu.memory_space<vmem>>, vector<1x32x128xf32>
    %39 = arith.addf %35, %37 : vector<1x32x128xf32>
    %40 = arith.addf %36, %38 : vector<1x32x128xf32>
    %c0_52 = arith.constant 0 : index
    %c0_53 = arith.constant 0 : index
    %c1152 = arith.constant 1152 : index
    %41 = vector.load %arg3[%c0_52, %c0_53, %c1152] : memref<2x32x4096xf32, #tpu.memory_space<vmem>>, vector<1x32x128xf32>
    %c0_54 = arith.constant 0 : index
    %c0_55 = arith.constant 0 : index
    %c1152_56 = arith.constant 1152 : index
    %42 = vector.load %arg4[%c0_54, %c0_55, %c1152_56] : memref<2x32x4096xf32, #tpu.memory_space<vmem>>, vector<1x32x128xf32>
    %43 = arith.addf %39, %41 : vector<1x32x128xf32>
    %44 = arith.addf %40, %42 : vector<1x32x128xf32>
    %c0_57 = arith.constant 0 : index
    %c0_58 = arith.constant 0 : index
    %c1280 = arith.constant 1280 : index
    %45 = vector.load %arg3[%c0_57, %c0_58, %c1280] : memref<2x32x4096xf32, #tpu.memory_space<vmem>>, vector<1x32x128xf32>
    %c0_59 = arith.constant 0 : index
    %c0_60 = arith.constant 0 : index
    %c1280_61 = arith.constant 1280 : index
    %46 = vector.load %arg4[%c0_59, %c0_60, %c1280_61] : memref<2x32x4096xf32, #tpu.memory_space<vmem>>, vector<1x32x128xf32>
    %47 = arith.addf %43, %45 : vector<1x32x128xf32>
    %48 = arith.addf %44, %46 : vector<1x32x128xf32>
    %c0_62 = arith.constant 0 : index
    %c0_63 = arith.constant 0 : index
    %c1408 = arith.constant 1408 : index
    %49 = vector.load %arg3[%c0_62, %c0_63, %c1408] : memref<2x32x4096xf32, #tpu.memory_space<vmem>>, vector<1x32x128xf32>
    %c0_64 = arith.constant 0 : index
    %c0_65 = arith.constant 0 : index
    %c1408_66 = arith.constant 1408 : index
    %50 = vector.load %arg4[%c0_64, %c0_65, %c1408_66] : memref<2x32x4096xf32, #tpu.memory_space<vmem>>, vector<1x32x128xf32>
    %51 = arith.addf %47, %49 : vector<1x32x128xf32>
    %52 = arith.addf %48, %50 : vector<1x32x128xf32>
    %c0_67 = arith.constant 0 : index
    %c0_68 = arith.constant 0 : index
    %c1536 = arith.constant 1536 : index
    %53 = vector.load %arg3[%c0_67, %c0_68, %c1536] : memref<2x32x4096xf32, #tpu.memory_space<vmem>>, vector<1x32x128xf32>
    %c0_69 = arith.constant 0 : index
    %c0_70 = arith.constant 0 : index
    %c1536_71 = arith.constant 1536 : index
    %54 = vector.load %arg4[%c0_69, %c0_70, %c1536_71] : memref<2x32x4096xf32, #tpu.memory_space<vmem>>, vector<1x32x128xf32>
    %55 = arith.addf %51, %53 : vector<1x32x128xf32>
    %56 = arith.addf %52, %54 : vector<1x32x128xf32>
    %c0_72 = arith.constant 0 : index
    %c0_73 = arith.constant 0 : index
    %c1664 = arith.constant 1664 : index
    %57 = vector.load %arg3[%c0_72, %c0_73, %c1664] : memref<2x32x4096xf32, #tpu.memory_space<vmem>>, vector<1x32x128xf32>
    %c0_74 = arith.constant 0 : index
    %c0_75 = arith.constant 0 : index
    %c1664_76 = arith.constant 1664 : index
    %58 = vector.load %arg4[%c0_74, %c0_75, %c1664_76] : memref<2x32x4096xf32, #tpu.memory_space<vmem>>, vector<1x32x128xf32>
    %59 = arith.addf %55, %57 : vector<1x32x128xf32>
    %60 = arith.addf %56, %58 : vector<1x32x128xf32>
    %c0_77 = arith.constant 0 : index
    %c0_78 = arith.constant 0 : index
    %c1792 = arith.constant 1792 : index
    %61 = vector.load %arg3[%c0_77, %c0_78, %c1792] : memref<2x32x4096xf32, #tpu.memory_space<vmem>>, vector<1x32x128xf32>
    %c0_79 = arith.constant 0 : index
    %c0_80 = arith.constant 0 : index
    %c1792_81 = arith.constant 1792 : index
    %62 = vector.load %arg4[%c0_79, %c0_80, %c1792_81] : memref<2x32x4096xf32, #tpu.memory_space<vmem>>, vector<1x32x128xf32>
    %63 = arith.addf %59, %61 : vector<1x32x128xf32>
    %64 = arith.addf %60, %62 : vector<1x32x128xf32>
    %c0_82 = arith.constant 0 : index
    %c0_83 = arith.constant 0 : index
    %c1920 = arith.constant 1920 : index
    %65 = vector.load %arg3[%c0_82, %c0_83, %c1920] : memref<2x32x4096xf32, #tpu.memory_space<vmem>>, vector<1x32x128xf32>
    %c0_84 = arith.constant 0 : index
    %c0_85 = arith.constant 0 : index
    %c1920_86 = arith.constant 1920 : index
    %66 = vector.load %arg4[%c0_84, %c0_85, %c1920_86] : memref<2x32x4096xf32, #tpu.memory_space<vmem>>, vector<1x32x128xf32>
    %67 = arith.addf %63, %65 : vector<1x32x128xf32>
    %68 = arith.addf %64, %66 : vector<1x32x128xf32>
    %c0_87 = arith.constant 0 : index
    %c0_88 = arith.constant 0 : index
    %c2048 = arith.constant 2048 : index
    %69 = vector.load %arg3[%c0_87, %c0_88, %c2048] : memref<2x32x4096xf32, #tpu.memory_space<vmem>>, vector<1x32x128xf32>
    %c0_89 = arith.constant 0 : index
    %c0_90 = arith.constant 0 : index
    %c2048_91 = arith.constant 2048 : index
    %70 = vector.load %arg4[%c0_89, %c0_90, %c2048_91] : memref<2x32x4096xf32, #tpu.memory_space<vmem>>, vector<1x32x128xf32>
    %71 = arith.addf %67, %69 : vector<1x32x128xf32>
    %72 = arith.addf %68, %70 : vector<1x32x128xf32>
    %c0_92 = arith.constant 0 : index
    %c0_93 = arith.constant 0 : index
    %c2176 = arith.constant 2176 : index
    %73 = vector.load %arg3[%c0_92, %c0_93, %c2176] : memref<2x32x4096xf32, #tpu.memory_space<vmem>>, vector<1x32x128xf32>
    %c0_94 = arith.constant 0 : index
    %c0_95 = arith.constant 0 : index
    %c2176_96 = arith.constant 2176 : index
    %74 = vector.load %arg4[%c0_94, %c0_95, %c2176_96] : memref<2x32x4096xf32, #tpu.memory_space<vmem>>, vector<1x32x128xf32>
    %75 = arith.addf %71, %73 : vector<1x32x128xf32>
    %76 = arith.addf %72, %74 : vector<1x32x128xf32>
    %c0_97 = arith.constant 0 : index
    %c0_98 = arith.constant 0 : index
    %c2304 = arith.constant 2304 : index
    %77 = vector.load %arg3[%c0_97, %c0_98, %c2304] : memref<2x32x4096xf32, #tpu.memory_space<vmem>>, vector<1x32x128xf32>
    %c0_99 = arith.constant 0 : index
    %c0_100 = arith.constant 0 : index
    %c2304_101 = arith.constant 2304 : index
    %78 = vector.load %arg4[%c0_99, %c0_100, %c2304_101] : memref<2x32x4096xf32, #tpu.memory_space<vmem>>, vector<1x32x128xf32>
    %79 = arith.addf %75, %77 : vector<1x32x128xf32>
    %80 = arith.addf %76, %78 : vector<1x32x128xf32>
    %c0_102 = arith.constant 0 : index
    %c0_103 = arith.constant 0 : index
    %c2432 = arith.constant 2432 : index
    %81 = vector.load %arg3[%c0_102, %c0_103, %c2432] : memref<2x32x4096xf32, #tpu.memory_space<vmem>>, vector<1x32x128xf32>
    %c0_104 = arith.constant 0 : index
    %c0_105 = arith.constant 0 : index
    %c2432_106 = arith.constant 2432 : index
    %82 = vector.load %arg4[%c0_104, %c0_105, %c2432_106] : memref<2x32x4096xf32, #tpu.memory_space<vmem>>, vector<1x32x128xf32>
    %83 = arith.addf %79, %81 : vector<1x32x128xf32>
    %84 = arith.addf %80, %82 : vector<1x32x128xf32>
    %c0_107 = arith.constant 0 : index
    %c0_108 = arith.constant 0 : index
    %c2560 = arith.constant 2560 : index
    %85 = vector.load %arg3[%c0_107, %c0_108, %c2560] : memref<2x32x4096xf32, #tpu.memory_space<vmem>>, vector<1x32x128xf32>
    %c0_109 = arith.constant 0 : index
    %c0_110 = arith.constant 0 : index
    %c2560_111 = arith.constant 2560 : index
    %86 = vector.load %arg4[%c0_109, %c0_110, %c2560_111] : memref<2x32x4096xf32, #tpu.memory_space<vmem>>, vector<1x32x128xf32>
    %87 = arith.addf %83, %85 : vector<1x32x128xf32>
    %88 = arith.addf %84, %86 : vector<1x32x128xf32>
    %c0_112 = arith.constant 0 : index
    %c0_113 = arith.constant 0 : index
    %c2688 = arith.constant 2688 : index
    %89 = vector.load %arg3[%c0_112, %c0_113, %c2688] : memref<2x32x4096xf32, #tpu.memory_space<vmem>>, vector<1x32x128xf32>
    %c0_114 = arith.constant 0 : index
    %c0_115 = arith.constant 0 : index
    %c2688_116 = arith.constant 2688 : index
    %90 = vector.load %arg4[%c0_114, %c0_115, %c2688_116] : memref<2x32x4096xf32, #tpu.memory_space<vmem>>, vector<1x32x128xf32>
    %91 = arith.addf %87, %89 : vector<1x32x128xf32>
    %92 = arith.addf %88, %90 : vector<1x32x128xf32>
    %c0_117 = arith.constant 0 : index
    %c0_118 = arith.constant 0 : index
    %c2816 = arith.constant 2816 : index
    %93 = vector.load %arg3[%c0_117, %c0_118, %c2816] : memref<2x32x4096xf32, #tpu.memory_space<vmem>>, vector<1x32x128xf32>
    %c0_119 = arith.constant 0 : index
    %c0_120 = arith.constant 0 : index
    %c2816_121 = arith.constant 2816 : index
    %94 = vector.load %arg4[%c0_119, %c0_120, %c2816_121] : memref<2x32x4096xf32, #tpu.memory_space<vmem>>, vector<1x32x128xf32>
    %95 = arith.addf %91, %93 : vector<1x32x128xf32>
    %96 = arith.addf %92, %94 : vector<1x32x128xf32>
    %c0_122 = arith.constant 0 : index
    %c0_123 = arith.constant 0 : index
    %c2944 = arith.constant 2944 : index
    %97 = vector.load %arg3[%c0_122, %c0_123, %c2944] : memref<2x32x4096xf32, #tpu.memory_space<vmem>>, vector<1x32x128xf32>
    %c0_124 = arith.constant 0 : index
    %c0_125 = arith.constant 0 : index
    %c2944_126 = arith.constant 2944 : index
    %98 = vector.load %arg4[%c0_124, %c0_125, %c2944_126] : memref<2x32x4096xf32, #tpu.memory_space<vmem>>, vector<1x32x128xf32>
    %99 = arith.addf %95, %97 : vector<1x32x128xf32>
    %100 = arith.addf %96, %98 : vector<1x32x128xf32>
    %c0_127 = arith.constant 0 : index
    %c0_128 = arith.constant 0 : index
    %c3072 = arith.constant 3072 : index
    %101 = vector.load %arg3[%c0_127, %c0_128, %c3072] : memref<2x32x4096xf32, #tpu.memory_space<vmem>>, vector<1x32x128xf32>
    %c0_129 = arith.constant 0 : index
    %c0_130 = arith.constant 0 : index
    %c3072_131 = arith.constant 3072 : index
    %102 = vector.load %arg4[%c0_129, %c0_130, %c3072_131] : memref<2x32x4096xf32, #tpu.memory_space<vmem>>, vector<1x32x128xf32>
    %103 = arith.addf %99, %101 : vector<1x32x128xf32>
    %104 = arith.addf %100, %102 : vector<1x32x128xf32>
    %c0_132 = arith.constant 0 : index
    %c0_133 = arith.constant 0 : index
    %c3200 = arith.constant 3200 : index
    %105 = vector.load %arg3[%c0_132, %c0_133, %c3200] : memref<2x32x4096xf32, #tpu.memory_space<vmem>>, vector<1x32x128xf32>
    %c0_134 = arith.constant 0 : index
    %c0_135 = arith.constant 0 : index
    %c3200_136 = arith.constant 3200 : index
    %106 = vector.load %arg4[%c0_134, %c0_135, %c3200_136] : memref<2x32x4096xf32, #tpu.memory_space<vmem>>, vector<1x32x128xf32>
    %107 = arith.addf %103, %105 : vector<1x32x128xf32>
    %108 = arith.addf %104, %106 : vector<1x32x128xf32>
    %c0_137 = arith.constant 0 : index
    %c0_138 = arith.constant 0 : index
    %c3328 = arith.constant 3328 : index
    %109 = vector.load %arg3[%c0_137, %c0_138, %c3328] : memref<2x32x4096xf32, #tpu.memory_space<vmem>>, vector<1x32x128xf32>
    %c0_139 = arith.constant 0 : index
    %c0_140 = arith.constant 0 : index
    %c3328_141 = arith.constant 3328 : index
    %110 = vector.load %arg4[%c0_139, %c0_140, %c3328_141] : memref<2x32x4096xf32, #tpu.memory_space<vmem>>, vector<1x32x128xf32>
    %111 = arith.addf %107, %109 : vector<1x32x128xf32>
    %112 = arith.addf %108, %110 : vector<1x32x128xf32>
    %c0_142 = arith.constant 0 : index
    %c0_143 = arith.constant 0 : index
    %c3456 = arith.constant 3456 : index
    %113 = vector.load %arg3[%c0_142, %c0_143, %c3456] : memref<2x32x4096xf32, #tpu.memory_space<vmem>>, vector<1x32x128xf32>
    %c0_144 = arith.constant 0 : index
    %c0_145 = arith.constant 0 : index
    %c3456_146 = arith.constant 3456 : index
    %114 = vector.load %arg4[%c0_144, %c0_145, %c3456_146] : memref<2x32x4096xf32, #tpu.memory_space<vmem>>, vector<1x32x128xf32>
    %115 = arith.addf %111, %113 : vector<1x32x128xf32>
    %116 = arith.addf %112, %114 : vector<1x32x128xf32>
    %c0_147 = arith.constant 0 : index
    %c0_148 = arith.constant 0 : index
    %c3584 = arith.constant 3584 : index
    %117 = vector.load %arg3[%c0_147, %c0_148, %c3584] : memref<2x32x4096xf32, #tpu.memory_space<vmem>>, vector<1x32x128xf32>
    %c0_149 = arith.constant 0 : index
    %c0_150 = arith.constant 0 : index
    %c3584_151 = arith.constant 3584 : index
    %118 = vector.load %arg4[%c0_149, %c0_150, %c3584_151] : memref<2x32x4096xf32, #tpu.memory_space<vmem>>, vector<1x32x128xf32>
    %119 = arith.addf %115, %117 : vector<1x32x128xf32>
    %120 = arith.addf %116, %118 : vector<1x32x128xf32>
    %c0_152 = arith.constant 0 : index
    %c0_153 = arith.constant 0 : index
    %c3712 = arith.constant 3712 : index
    %121 = vector.load %arg3[%c0_152, %c0_153, %c3712] : memref<2x32x4096xf32, #tpu.memory_space<vmem>>, vector<1x32x128xf32>
    %c0_154 = arith.constant 0 : index
    %c0_155 = arith.constant 0 : index
    %c3712_156 = arith.constant 3712 : index
    %122 = vector.load %arg4[%c0_154, %c0_155, %c3712_156] : memref<2x32x4096xf32, #tpu.memory_space<vmem>>, vector<1x32x128xf32>
    %123 = arith.addf %119, %121 : vector<1x32x128xf32>
    %124 = arith.addf %120, %122 : vector<1x32x128xf32>
    %c0_157 = arith.constant 0 : index
    %c0_158 = arith.constant 0 : index
    %c3840 = arith.constant 3840 : index
    %125 = vector.load %arg3[%c0_157, %c0_158, %c3840] : memref<2x32x4096xf32, #tpu.memory_space<vmem>>, vector<1x32x128xf32>
    %c0_159 = arith.constant 0 : index
    %c0_160 = arith.constant 0 : index
    %c3840_161 = arith.constant 3840 : index
    %126 = vector.load %arg4[%c0_159, %c0_160, %c3840_161] : memref<2x32x4096xf32, #tpu.memory_space<vmem>>, vector<1x32x128xf32>
    %127 = arith.addf %123, %125 : vector<1x32x128xf32>
    %128 = arith.addf %124, %126 : vector<1x32x128xf32>
    %c0_162 = arith.constant 0 : index
    %c0_163 = arith.constant 0 : index
    %c3968 = arith.constant 3968 : index
    %129 = vector.load %arg3[%c0_162, %c0_163, %c3968] : memref<2x32x4096xf32, #tpu.memory_space<vmem>>, vector<1x32x128xf32>
    %c0_164 = arith.constant 0 : index
    %c0_165 = arith.constant 0 : index
    %c3968_166 = arith.constant 3968 : index
    %130 = vector.load %arg4[%c0_164, %c0_165, %c3968_166] : memref<2x32x4096xf32, #tpu.memory_space<vmem>>, vector<1x32x128xf32>
    %131 = arith.addf %127, %129 : vector<1x32x128xf32>
    %132 = arith.addf %128, %130 : vector<1x32x128xf32>
    %c0_167 = arith.constant 0 : index
    %c0_168 = arith.constant 0 : index
    %c0_169 = arith.constant 0 : index
    %133 = vector.load %arg6[%c0_167, %c0_168, %c0_169] : memref<2x32x128xf32, #tpu.memory_space<vmem>>, vector<1x32x128xf32>
    tpu.vector_store %arg6[%c0_167, %c0_168, %c0_169], %131 {strides = array<i32>} : memref<2x32x128xf32, #tpu.memory_space<vmem>>, vector<1x32x128xf32>,
    %c0_170 = arith.constant 0 : index
    %c0_171 = arith.constant 0 : index
    %c0_172 = arith.constant 0 : index
    %134 = vector.load %arg7[%c0_170, %c0_171, %c0_172] : memref<2x32x128xf32, #tpu.memory_space<vmem>>, vector<1x32x128xf32>
    tpu.vector_store %arg7[%c0_170, %c0_171, %c0_172], %132 {strides = array<i32>} : memref<2x32x128xf32, #tpu.memory_space<vmem>>, vector<1x32x128xf32>,
    %c1 = arith.constant 1 : index
    %c0_173 = arith.constant 0 : index
    %c0_174 = arith.constant 0 : index
    %135 = vector.load %arg6[%c1, %c0_173, %c0_174] : memref<2x32x128xf32, #tpu.memory_space<vmem>>, vector<1x32x128xf32>
    %c1_175 = arith.constant 1 : index
    %c0_176 = arith.constant 0 : index
    %c0_177 = arith.constant 0 : index
    %136 = vector.load %arg7[%c1_175, %c0_176, %c0_177] : memref<2x32x128xf32, #tpu.memory_space<vmem>>, vector<1x32x128xf32>
    %c1_178 = arith.constant 1 : index
    %c0_179 = arith.constant 0 : index
    %c0_180 = arith.constant 0 : index
    %137 = vector.load %arg3[%c1_178, %c0_179, %c0_180] : memref<2x32x4096xf32, #tpu.memory_space<vmem>>, vector<1x32x128xf32>
    %c1_181 = arith.constant 1 : index
    %c0_182 = arith.constant 0 : index
    %c0_183 = arith.constant 0 : index
    %138 = vector.load %arg4[%c1_181, %c0_182, %c0_183] : memref<2x32x4096xf32, #tpu.memory_space<vmem>>, vector<1x32x128xf32>
    %139 = arith.addf %135, %137 : vector<1x32x128xf32>
    %140 = arith.addf %136, %138 : vector<1x32x128xf32>
    %c1_184 = arith.constant 1 : index
    %c0_185 = arith.constant 0 : index
    %c128_186 = arith.constant 128 : index
    %141 = vector.load %arg3[%c1_184, %c0_185, %c128_186] : memref<2x32x4096xf32, #tpu.memory_space<vmem>>, vector<1x32x128xf32>
    %c1_187 = arith.constant 1 : index
    %c0_188 = arith.constant 0 : index
    %c128_189 = arith.constant 128 : index
    %142 = vector.load %arg4[%c1_187, %c0_188, %c128_189] : memref<2x32x4096xf32, #tpu.memory_space<vmem>>, vector<1x32x128xf32>
    %143 = arith.addf %139, %141 : vector<1x32x128xf32>
    %144 = arith.addf %140, %142 : vector<1x32x128xf32>
    %c1_190 = arith.constant 1 : index
    %c0_191 = arith.constant 0 : index
    %c256_192 = arith.constant 256 : index
    %145 = vector.load %arg3[%c1_190, %c0_191, %c256_192] : memref<2x32x4096xf32, #tpu.memory_space<vmem>>, vector<1x32x128xf32>
    %c1_193 = arith.constant 1 : index
    %c0_194 = arith.constant 0 : index
    %c256_195 = arith.constant 256 : index
    %146 = vector.load %arg4[%c1_193, %c0_194, %c256_195] : memref<2x32x4096xf32, #tpu.memory_space<vmem>>, vector<1x32x128xf32>
    %147 = arith.addf %143, %145 : vector<1x32x128xf32>
    %148 = arith.addf %144, %146 : vector<1x32x128xf32>
    %c1_196 = arith.constant 1 : index
    %c0_197 = arith.constant 0 : index
    %c384_198 = arith.constant 384 : index
    %149 = vector.load %arg3[%c1_196, %c0_197, %c384_198] : memref<2x32x4096xf32, #tpu.memory_space<vmem>>, vector<1x32x128xf32>
    %c1_199 = arith.constant 1 : index
    %c0_200 = arith.constant 0 : index
    %c384_201 = arith.constant 384 : index
    %150 = vector.load %arg4[%c1_199, %c0_200, %c384_201] : memref<2x32x4096xf32, #tpu.memory_space<vmem>>, vector<1x32x128xf32>
    %151 = arith.addf %147, %149 : vector<1x32x128xf32>
    %152 = arith.addf %148, %150 : vector<1x32x128xf32>
    %c1_202 = arith.constant 1 : index
    %c0_203 = arith.constant 0 : index
    %c512_204 = arith.constant 512 : index
    %153 = vector.load %arg3[%c1_202, %c0_203, %c512_204] : memref<2x32x4096xf32, #tpu.memory_space<vmem>>, vector<1x32x128xf32>
    %c1_205 = arith.constant 1 : index
    %c0_206 = arith.constant 0 : index
    %c512_207 = arith.constant 512 : index
    %154 = vector.load %arg4[%c1_205, %c0_206, %c512_207] : memref<2x32x4096xf32, #tpu.memory_space<vmem>>, vector<1x32x128xf32>
    %155 = arith.addf %151, %153 : vector<1x32x128xf32>
    %156 = arith.addf %152, %154 : vector<1x32x128xf32>
    %c1_208 = arith.constant 1 : index
    %c0_209 = arith.constant 0 : index
    %c640_210 = arith.constant 640 : index
    %157 = vector.load %arg3[%c1_208, %c0_209, %c640_210] : memref<2x32x4096xf32, #tpu.memory_space<vmem>>, vector<1x32x128xf32>
    %c1_211 = arith.constant 1 : index
    %c0_212 = arith.constant 0 : index
    %c640_213 = arith.constant 640 : index
    %158 = vector.load %arg4[%c1_211, %c0_212, %c640_213] : memref<2x32x4096xf32, #tpu.memory_space<vmem>>, vector<1x32x128xf32>
    %159 = arith.addf %155, %157 : vector<1x32x128xf32>
    %160 = arith.addf %156, %158 : vector<1x32x128xf32>
    %c1_214 = arith.constant 1 : index
    %c0_215 = arith.constant 0 : index
    %c768_216 = arith.constant 768 : index
    %161 = vector.load %arg3[%c1_214, %c0_215, %c768_216] : memref<2x32x4096xf32, #tpu.memory_space<vmem>>, vector<1x32x128xf32>
    %c1_217 = arith.constant 1 : index
    %c0_218 = arith.constant 0 : index
    %c768_219 = arith.constant 768 : index
    %162 = vector.load %arg4[%c1_217, %c0_218, %c768_219] : memref<2x32x4096xf32, #tpu.memory_space<vmem>>, vector<1x32x128xf32>
    %163 = arith.addf %159, %161 : vector<1x32x128xf32>
    %164 = arith.addf %160, %162 : vector<1x32x128xf32>
    %c1_220 = arith.constant 1 : index
    %c0_221 = arith.constant 0 : index
    %c896_222 = arith.constant 896 : index
    %165 = vector.load %arg3[%c1_220, %c0_221, %c896_222] : memref<2x32x4096xf32, #tpu.memory_space<vmem>>, vector<1x32x128xf32>
    %c1_223 = arith.constant 1 : index
    %c0_224 = arith.constant 0 : index
    %c896_225 = arith.constant 896 : index
    %166 = vector.load %arg4[%c1_223, %c0_224, %c896_225] : memref<2x32x4096xf32, #tpu.memory_space<vmem>>, vector<1x32x128xf32>
    %167 = arith.addf %163, %165 : vector<1x32x128xf32>
    %168 = arith.addf %164, %166 : vector<1x32x128xf32>
    %c1_226 = arith.constant 1 : index
    %c0_227 = arith.constant 0 : index
    %c1024_228 = arith.constant 1024 : index
    %169 = vector.load %arg3[%c1_226, %c0_227, %c1024_228] : memref<2x32x4096xf32, #tpu.memory_space<vmem>>, vector<1x32x128xf32>
    %c1_229 = arith.constant 1 : index
    %c0_230 = arith.constant 0 : index
    %c1024_231 = arith.constant 1024 : index
    %170 = vector.load %arg4[%c1_229, %c0_230, %c1024_231] : memref<2x32x4096xf32, #tpu.memory_space<vmem>>, vector<1x32x128xf32>
    %171 = arith.addf %167, %169 : vector<1x32x128xf32>
    %172 = arith.addf %168, %170 : vector<1x32x128xf32>
    %c1_232 = arith.constant 1 : index
    %c0_233 = arith.constant 0 : index
    %c1152_234 = arith.constant 1152 : index
    %173 = vector.load %arg3[%c1_232, %c0_233, %c1152_234] : memref<2x32x4096xf32, #tpu.memory_space<vmem>>, vector<1x32x128xf32>
    %c1_235 = arith.constant 1 : index
    %c0_236 = arith.constant 0 : index
    %c1152_237 = arith.constant 1152 : index
    %174 = vector.load %arg4[%c1_235, %c0_236, %c1152_237] : memref<2x32x4096xf32, #tpu.memory_space<vmem>>, vector<1x32x128xf32>
    %175 = arith.addf %171, %173 : vector<1x32x128xf32>
    %176 = arith.addf %172, %174 : vector<1x32x128xf32>
    %c1_238 = arith.constant 1 : index
    %c0_239 = arith.constant 0 : index
    %c1280_240 = arith.constant 1280 : index
    %177 = vector.load %arg3[%c1_238, %c0_239, %c1280_240] : memref<2x32x4096xf32, #tpu.memory_space<vmem>>, vector<1x32x128xf32>
    %c1_241 = arith.constant 1 : index
    %c0_242 = arith.constant 0 : index
    %c1280_243 = arith.constant 1280 : index
    %178 = vector.load %arg4[%c1_241, %c0_242, %c1280_243] : memref<2x32x4096xf32, #tpu.memory_space<vmem>>, vector<1x32x128xf32>
    %179 = arith.addf %175, %177 : vector<1x32x128xf32>
    %180 = arith.addf %176, %178 : vector<1x32x128xf32>
    %c1_244 = arith.constant 1 : index
    %c0_245 = arith.constant 0 : index
    %c1408_246 = arith.constant 1408 : index
    %181 = vector.load %arg3[%c1_244, %c0_245, %c1408_246] : memref<2x32x4096xf32, #tpu.memory_space<vmem>>, vector<1x32x128xf32>
    %c1_247 = arith.constant 1 : index
    %c0_248 = arith.constant 0 : index
    %c1408_249 = arith.constant 1408 : index
    %182 = vector.load %arg4[%c1_247, %c0_248, %c1408_249] : memref<2x32x4096xf32, #tpu.memory_space<vmem>>, vector<1x32x128xf32>
    %183 = arith.addf %179, %181 : vector<1x32x128xf32>
    %184 = arith.addf %180, %182 : vector<1x32x128xf32>
    %c1_250 = arith.constant 1 : index
    %c0_251 = arith.constant 0 : index
    %c1536_252 = arith.constant 1536 : index
    %185 = vector.load %arg3[%c1_250, %c0_251, %c1536_252] : memref<2x32x4096xf32, #tpu.memory_space<vmem>>, vector<1x32x128xf32>
    %c1_253 = arith.constant 1 : index
    %c0_254 = arith.constant 0 : index
    %c1536_255 = arith.constant 1536 : index
    %186 = vector.load %arg4[%c1_253, %c0_254, %c1536_255] : memref<2x32x4096xf32, #tpu.memory_space<vmem>>, vector<1x32x128xf32>
    %187 = arith.addf %183, %185 : vector<1x32x128xf32>
    %188 = arith.addf %184, %186 : vector<1x32x128xf32>
    %c1_256 = arith.constant 1 : index
    %c0_257 = arith.constant 0 : index
    %c1664_258 = arith.constant 1664 : index
    %189 = vector.load %arg3[%c1_256, %c0_257, %c1664_258] : memref<2x32x4096xf32, #tpu.memory_space<vmem>>, vector<1x32x128xf32>
    %c1_259 = arith.constant 1 : index
    %c0_260 = arith.constant 0 : index
    %c1664_261 = arith.constant 1664 : index
    %190 = vector.load %arg4[%c1_259, %c0_260, %c1664_261] : memref<2x32x4096xf32, #tpu.memory_space<vmem>>, vector<1x32x128xf32>
    %191 = arith.addf %187, %189 : vector<1x32x128xf32>
    %192 = arith.addf %188, %190 : vector<1x32x128xf32>
    %c1_262 = arith.constant 1 : index
    %c0_263 = arith.constant 0 : index
    %c1792_264 = arith.constant 1792 : index
    %193 = vector.load %arg3[%c1_262, %c0_263, %c1792_264] : memref<2x32x4096xf32, #tpu.memory_space<vmem>>, vector<1x32x128xf32>
    %c1_265 = arith.constant 1 : index
    %c0_266 = arith.constant 0 : index
    %c1792_267 = arith.constant 1792 : index
    %194 = vector.load %arg4[%c1_265, %c0_266, %c1792_267] : memref<2x32x4096xf32, #tpu.memory_space<vmem>>, vector<1x32x128xf32>
    %195 = arith.addf %191, %193 : vector<1x32x128xf32>
    %196 = arith.addf %192, %194 : vector<1x32x128xf32>
    %c1_268 = arith.constant 1 : index
    %c0_269 = arith.constant 0 : index
    %c1920_270 = arith.constant 1920 : index
    %197 = vector.load %arg3[%c1_268, %c0_269, %c1920_270] : memref<2x32x4096xf32, #tpu.memory_space<vmem>>, vector<1x32x128xf32>
    %c1_271 = arith.constant 1 : index
    %c0_272 = arith.constant 0 : index
    %c1920_273 = arith.constant 1920 : index
    %198 = vector.load %arg4[%c1_271, %c0_272, %c1920_273] : memref<2x32x4096xf32, #tpu.memory_space<vmem>>, vector<1x32x128xf32>
    %199 = arith.addf %195, %197 : vector<1x32x128xf32>
    %200 = arith.addf %196, %198 : vector<1x32x128xf32>
    %c1_274 = arith.constant 1 : index
    %c0_275 = arith.constant 0 : index
    %c2048_276 = arith.constant 2048 : index
    %201 = vector.load %arg3[%c1_274, %c0_275, %c2048_276] : memref<2x32x4096xf32, #tpu.memory_space<vmem>>, vector<1x32x128xf32>
    %c1_277 = arith.constant 1 : index
    %c0_278 = arith.constant 0 : index
    %c2048_279 = arith.constant 2048 : index
    %202 = vector.load %arg4[%c1_277, %c0_278, %c2048_279] : memref<2x32x4096xf32, #tpu.memory_space<vmem>>, vector<1x32x128xf32>
    %203 = arith.addf %199, %201 : vector<1x32x128xf32>
    %204 = arith.addf %200, %202 : vector<1x32x128xf32>
    %c1_280 = arith.constant 1 : index
    %c0_281 = arith.constant 0 : index
    %c2176_282 = arith.constant 2176 : index
    %205 = vector.load %arg3[%c1_280, %c0_281, %c2176_282] : memref<2x32x4096xf32, #tpu.memory_space<vmem>>, vector<1x32x128xf32>
    %c1_283 = arith.constant 1 : index
    %c0_284 = arith.constant 0 : index
    %c2176_285 = arith.constant 2176 : index
    %206 = vector.load %arg4[%c1_283, %c0_284, %c2176_285] : memref<2x32x4096xf32, #tpu.memory_space<vmem>>, vector<1x32x128xf32>
    %207 = arith.addf %203, %205 : vector<1x32x128xf32>
    %208 = arith.addf %204, %206 : vector<1x32x128xf32>
    %c1_286 = arith.constant 1 : index
    %c0_287 = arith.constant 0 : index
    %c2304_288 = arith.constant 2304 : index
    %209 = vector.load %arg3[%c1_286, %c0_287, %c2304_288] : memref<2x32x4096xf32, #tpu.memory_space<vmem>>, vector<1x32x128xf32>
    %c1_289 = arith.constant 1 : index
    %c0_290 = arith.constant 0 : index
    %c2304_291 = arith.constant 2304 : index
    %210 = vector.load %arg4[%c1_289, %c0_290, %c2304_291] : memref<2x32x4096xf32, #tpu.memory_space<vmem>>, vector<1x32x128xf32>
    %211 = arith.addf %207, %209 : vector<1x32x128xf32>
    %212 = arith.addf %208, %210 : vector<1x32x128xf32>
    %c1_292 = arith.constant 1 : index
    %c0_293 = arith.constant 0 : index
    %c2432_294 = arith.constant 2432 : index
    %213 = vector.load %arg3[%c1_292, %c0_293, %c2432_294] : memref<2x32x4096xf32, #tpu.memory_space<vmem>>, vector<1x32x128xf32>
    %c1_295 = arith.constant 1 : index
    %c0_296 = arith.constant 0 : index
    %c2432_297 = arith.constant 2432 : index
    %214 = vector.load %arg4[%c1_295, %c0_296, %c2432_297] : memref<2x32x4096xf32, #tpu.memory_space<vmem>>, vector<1x32x128xf32>
    %215 = arith.addf %211, %213 : vector<1x32x128xf32>
    %216 = arith.addf %212, %214 : vector<1x32x128xf32>
    %c1_298 = arith.constant 1 : index
    %c0_299 = arith.constant 0 : index
    %c2560_300 = arith.constant 2560 : index
    %217 = vector.load %arg3[%c1_298, %c0_299, %c2560_300] : memref<2x32x4096xf32, #tpu.memory_space<vmem>>, vector<1x32x128xf32>
    %c1_301 = arith.constant 1 : index
    %c0_302 = arith.constant 0 : index
    %c2560_303 = arith.constant 2560 : index
    %218 = vector.load %arg4[%c1_301, %c0_302, %c2560_303] : memref<2x32x4096xf32, #tpu.memory_space<vmem>>, vector<1x32x128xf32>
    %219 = arith.addf %215, %217 : vector<1x32x128xf32>
    %220 = arith.addf %216, %218 : vector<1x32x128xf32>
    %c1_304 = arith.constant 1 : index
    %c0_305 = arith.constant 0 : index
    %c2688_306 = arith.constant 2688 : index
    %221 = vector.load %arg3[%c1_304, %c0_305, %c2688_306] : memref<2x32x4096xf32, #tpu.memory_space<vmem>>, vector<1x32x128xf32>
    %c1_307 = arith.constant 1 : index
    %c0_308 = arith.constant 0 : index
    %c2688_309 = arith.constant 2688 : index
    %222 = vector.load %arg4[%c1_307, %c0_308, %c2688_309] : memref<2x32x4096xf32, #tpu.memory_space<vmem>>, vector<1x32x128xf32>
    %223 = arith.addf %219, %221 : vector<1x32x128xf32>
    %224 = arith.addf %220, %222 : vector<1x32x128xf32>
    %c1_310 = arith.constant 1 : index
    %c0_311 = arith.constant 0 : index
    %c2816_312 = arith.constant 2816 : index
    %225 = vector.load %arg3[%c1_310, %c0_311, %c2816_312] : memref<2x32x4096xf32, #tpu.memory_space<vmem>>, vector<1x32x128xf32>
    %c1_313 = arith.constant 1 : index
    %c0_314 = arith.constant 0 : index
    %c2816_315 = arith.constant 2816 : index
    %226 = vector.load %arg4[%c1_313, %c0_314, %c2816_315] : memref<2x32x4096xf32, #tpu.memory_space<vmem>>, vector<1x32x128xf32>
    %227 = arith.addf %223, %225 : vector<1x32x128xf32>
    %228 = arith.addf %224, %226 : vector<1x32x128xf32>
    %c1_316 = arith.constant 1 : index
    %c0_317 = arith.constant 0 : index
    %c2944_318 = arith.constant 2944 : index
    %229 = vector.load %arg3[%c1_316, %c0_317, %c2944_318] : memref<2x32x4096xf32, #tpu.memory_space<vmem>>, vector<1x32x128xf32>
    %c1_319 = arith.constant 1 : index
    %c0_320 = arith.constant 0 : index
    %c2944_321 = arith.constant 2944 : index
    %230 = vector.load %arg4[%c1_319, %c0_320, %c2944_321] : memref<2x32x4096xf32, #tpu.memory_space<vmem>>, vector<1x32x128xf32>
    %231 = arith.addf %227, %229 : vector<1x32x128xf32>
    %232 = arith.addf %228, %230 : vector<1x32x128xf32>
    %c1_322 = arith.constant 1 : index
    %c0_323 = arith.constant 0 : index
    %c3072_324 = arith.constant 3072 : index
    %233 = vector.load %arg3[%c1_322, %c0_323, %c3072_324] : memref<2x32x4096xf32, #tpu.memory_space<vmem>>, vector<1x32x128xf32>
    %c1_325 = arith.constant 1 : index
    %c0_326 = arith.constant 0 : index
    %c3072_327 = arith.constant 3072 : index
    %234 = vector.load %arg4[%c1_325, %c0_326, %c3072_327] : memref<2x32x4096xf32, #tpu.memory_space<vmem>>, vector<1x32x128xf32>
    %235 = arith.addf %231, %233 : vector<1x32x128xf32>
    %236 = arith.addf %232, %234 : vector<1x32x128xf32>
    %c1_328 = arith.constant 1 : index
    %c0_329 = arith.constant 0 : index
    %c3200_330 = arith.constant 3200 : index
    %237 = vector.load %arg3[%c1_328, %c0_329, %c3200_330] : memref<2x32x4096xf32, #tpu.memory_space<vmem>>, vector<1x32x128xf32>
    %c1_331 = arith.constant 1 : index
    %c0_332 = arith.constant 0 : index
    %c3200_333 = arith.constant 3200 : index
    %238 = vector.load %arg4[%c1_331, %c0_332, %c3200_333] : memref<2x32x4096xf32, #tpu.memory_space<vmem>>, vector<1x32x128xf32>
    %239 = arith.addf %235, %237 : vector<1x32x128xf32>
    %240 = arith.addf %236, %238 : vector<1x32x128xf32>
    %c1_334 = arith.constant 1 : index
    %c0_335 = arith.constant 0 : index
    %c3328_336 = arith.constant 3328 : index
    %241 = vector.load %arg3[%c1_334, %c0_335, %c3328_336] : memref<2x32x4096xf32, #tpu.memory_space<vmem>>, vector<1x32x128xf32>
    %c1_337 = arith.constant 1 : index
    %c0_338 = arith.constant 0 : index
    %c3328_339 = arith.constant 3328 : index
    %242 = vector.load %arg4[%c1_337, %c0_338, %c3328_339] : memref<2x32x4096xf32, #tpu.memory_space<vmem>>, vector<1x32x128xf32>
    %243 = arith.addf %239, %241 : vector<1x32x128xf32>
    %244 = arith.addf %240, %242 : vector<1x32x128xf32>
    %c1_340 = arith.constant 1 : index
    %c0_341 = arith.constant 0 : index
    %c3456_342 = arith.constant 3456 : index
    %245 = vector.load %arg3[%c1_340, %c0_341, %c3456_342] : memref<2x32x4096xf32, #tpu.memory_space<vmem>>, vector<1x32x128xf32>
    %c1_343 = arith.constant 1 : index
    %c0_344 = arith.constant 0 : index
    %c3456_345 = arith.constant 3456 : index
    %246 = vector.load %arg4[%c1_343, %c0_344, %c3456_345] : memref<2x32x4096xf32, #tpu.memory_space<vmem>>, vector<1x32x128xf32>
    %247 = arith.addf %243, %245 : vector<1x32x128xf32>
    %248 = arith.addf %244, %246 : vector<1x32x128xf32>
    %c1_346 = arith.constant 1 : index
    %c0_347 = arith.constant 0 : index
    %c3584_348 = arith.constant 3584 : index
    %249 = vector.load %arg3[%c1_346, %c0_347, %c3584_348] : memref<2x32x4096xf32, #tpu.memory_space<vmem>>, vector<1x32x128xf32>
    %c1_349 = arith.constant 1 : index
    %c0_350 = arith.constant 0 : index
    %c3584_351 = arith.constant 3584 : index
    %250 = vector.load %arg4[%c1_349, %c0_350, %c3584_351] : memref<2x32x4096xf32, #tpu.memory_space<vmem>>, vector<1x32x128xf32>
    %251 = arith.addf %247, %249 : vector<1x32x128xf32>
    %252 = arith.addf %248, %250 : vector<1x32x128xf32>
    %c1_352 = arith.constant 1 : index
    %c0_353 = arith.constant 0 : index
    %c3712_354 = arith.constant 3712 : index
    %253 = vector.load %arg3[%c1_352, %c0_353, %c3712_354] : memref<2x32x4096xf32, #tpu.memory_space<vmem>>, vector<1x32x128xf32>
    %c1_355 = arith.constant 1 : index
    %c0_356 = arith.constant 0 : index
    %c3712_357 = arith.constant 3712 : index
    %254 = vector.load %arg4[%c1_355, %c0_356, %c3712_357] : memref<2x32x4096xf32, #tpu.memory_space<vmem>>, vector<1x32x128xf32>
    %255 = arith.addf %251, %253 : vector<1x32x128xf32>
    %256 = arith.addf %252, %254 : vector<1x32x128xf32>
    %c1_358 = arith.constant 1 : index
    %c0_359 = arith.constant 0 : index
    %c3840_360 = arith.constant 3840 : index
    %257 = vector.load %arg3[%c1_358, %c0_359, %c3840_360] : memref<2x32x4096xf32, #tpu.memory_space<vmem>>, vector<1x32x128xf32>
    %c1_361 = arith.constant 1 : index
    %c0_362 = arith.constant 0 : index
    %c3840_363 = arith.constant 3840 : index
    %258 = vector.load %arg4[%c1_361, %c0_362, %c3840_363] : memref<2x32x4096xf32, #tpu.memory_space<vmem>>, vector<1x32x128xf32>
    %259 = arith.addf %255, %257 : vector<1x32x128xf32>
    %260 = arith.addf %256, %258 : vector<1x32x128xf32>
    %c1_364 = arith.constant 1 : index
    %c0_365 = arith.constant 0 : index
    %c3968_366 = arith.constant 3968 : index
    %261 = vector.load %arg3[%c1_364, %c0_365, %c3968_366] : memref<2x32x4096xf32, #tpu.memory_space<vmem>>, vector<1x32x128xf32>
    %c1_367 = arith.constant 1 : index
    %c0_368 = arith.constant 0 : index
    %c3968_369 = arith.constant 3968 : index
    %262 = vector.load %arg4[%c1_367, %c0_368, %c3968_369] : memref<2x32x4096xf32, #tpu.memory_space<vmem>>, vector<1x32x128xf32>
    %263 = arith.addf %259, %261 : vector<1x32x128xf32>
    %264 = arith.addf %260, %262 : vector<1x32x128xf32>
    %c1_370 = arith.constant 1 : index
    %c0_371 = arith.constant 0 : index
    %c0_372 = arith.constant 0 : index
    %265 = vector.load %arg6[%c1_370, %c0_371, %c0_372] : memref<2x32x128xf32, #tpu.memory_space<vmem>>, vector<1x32x128xf32>
    tpu.vector_store %arg6[%c1_370, %c0_371, %c0_372], %263 {strides = array<i32>} : memref<2x32x128xf32, #tpu.memory_space<vmem>>, vector<1x32x128xf32>,
    %c1_373 = arith.constant 1 : index
    %c0_374 = arith.constant 0 : index
    %c0_375 = arith.constant 0 : index
    %266 = vector.load %arg7[%c1_373, %c0_374, %c0_375] : memref<2x32x128xf32, #tpu.memory_space<vmem>>, vector<1x32x128xf32>
    tpu.vector_store %arg7[%c1_373, %c0_374, %c0_375], %264 {strides = array<i32>} : memref<2x32x128xf32, #tpu.memory_space<vmem>>, vector<1x32x128xf32>,
    %c0_i32_376 = arith.constant 0 : i32
    %267 = arith.cmpi eq, %arg2, %c0_i32_376 : i32
    %268 = arith.extui %267 : i1 to i32
    %c0_i32_377 = arith.constant 0 : i32
    %269 = arith.cmpi ne, %268, %c0_i32_377 : i32
    scf.if %269 {
      %c0_378 = arith.constant 0 : index
      %c0_379 = arith.constant 0 : index
      %c0_380 = arith.constant 0 : index
      %270 = vector.load %arg6[%c0_378, %c0_379, %c0_380] : memref<2x32x128xf32, #tpu.memory_space<vmem>>, vector<1x32x128xf32>
      %cst = arith.constant dense<0.000000e+00> : vector<1x32xf32>
      %271 = vector.multi_reduction <add>, %270, %cst [2] : vector<1x32x128xf32> to vector<1x32xf32>
      %c0_381 = arith.constant 0 : index
      %c0_382 = arith.constant 0 : index
      %c0_383 = arith.constant 0 : index
      %272 = vector.load %arg5[%c0_381, %c0_382, %c0_383] : memref<2x2x32xf32, #tpu.memory_space<vmem>>, vector<1x1x32xf32>
      %273 = vector.shape_cast %272 : vector<1x1x32xf32> to vector<1x32xf32>
      %274 = vector.shape_cast %271 : vector<1x32xf32> to vector<1x1x32xf32>
      tpu.vector_store %arg5[%c0_381, %c0_382, %c0_383], %274 {strides = array<i32>} : memref<2x2x32xf32, #tpu.memory_space<vmem>>, vector<1x1x32xf32>,
      %c0_384 = arith.constant 0 : index
      %c0_385 = arith.constant 0 : index
      %c0_386 = arith.constant 0 : index
      %275 = vector.load %arg7[%c0_384, %c0_385, %c0_386] : memref<2x32x128xf32, #tpu.memory_space<vmem>>, vector<1x32x128xf32>
      %cst_387 = arith.constant dense<0.000000e+00> : vector<1x32xf32>
      %276 = vector.multi_reduction <add>, %275, %cst_387 [2] : vector<1x32x128xf32> to vector<1x32xf32>
      %c0_388 = arith.constant 0 : index
      %c1_389 = arith.constant 1 : index
      %c0_390 = arith.constant 0 : index
      %277 = vector.load %arg5[%c0_388, %c1_389, %c0_390] : memref<2x2x32xf32, #tpu.memory_space<vmem>>, vector<1x1x32xf32>
      %278 = vector.shape_cast %277 : vector<1x1x32xf32> to vector<1x32xf32>
      %279 = vector.shape_cast %276 : vector<1x32xf32> to vector<1x1x32xf32>
      tpu.vector_store %arg5[%c0_388, %c1_389, %c0_390], %279 {strides = array<i32>} : memref<2x2x32xf32, #tpu.memory_space<vmem>>, vector<1x1x32xf32>,
      %c1_391 = arith.constant 1 : index
      %c0_392 = arith.constant 0 : index
      %c0_393 = arith.constant 0 : index
      %280 = vector.load %arg6[%c1_391, %c0_392, %c0_393] : memref<2x32x128xf32, #tpu.memory_space<vmem>>, vector<1x32x128xf32>
      %cst_394 = arith.constant dense<0.000000e+00> : vector<1x32xf32>
      %281 = vector.multi_reduction <add>, %280, %cst_394 [2] : vector<1x32x128xf32> to vector<1x32xf32>
      %c1_395 = arith.constant 1 : index
      %c0_396 = arith.constant 0 : index
      %c0_397 = arith.constant 0 : index
      %282 = vector.load %arg5[%c1_395, %c0_396, %c0_397] : memref<2x2x32xf32, #tpu.memory_space<vmem>>, vector<1x1x32xf32>
      %283 = vector.shape_cast %282 : vector<1x1x32xf32> to vector<1x32xf32>
      %284 = vector.shape_cast %281 : vector<1x32xf32> to vector<1x1x32xf32>
      tpu.vector_store %arg5[%c1_395, %c0_396, %c0_397], %284 {strides = array<i32>} : memref<2x2x32xf32, #tpu.memory_space<vmem>>, vector<1x1x32xf32>,
      %c1_398 = arith.constant 1 : index
      %c0_399 = arith.constant 0 : index
      %c0_400 = arith.constant 0 : index
      %285 = vector.load %arg7[%c1_398, %c0_399, %c0_400] : memref<2x32x128xf32, #tpu.memory_space<vmem>>, vector<1x32x128xf32>
      %cst_401 = arith.constant dense<0.000000e+00> : vector<1x32xf32>
      %286 = vector.multi_reduction <add>, %285, %cst_401 [2] : vector<1x32x128xf32> to vector<1x32xf32>
      %c1_402 = arith.constant 1 : index
      %c1_403 = arith.constant 1 : index
      %c0_404 = arith.constant 0 : index
      %287 = vector.load %arg5[%c1_402, %c1_403, %c0_404] : memref<2x2x32xf32, #tpu.memory_space<vmem>>, vector<1x1x32xf32>
      %288 = vector.shape_cast %287 : vector<1x1x32xf32> to vector<1x32xf32>
      %289 = vector.shape_cast %286 : vector<1x32xf32> to vector<1x1x32xf32>
      tpu.vector_store %arg5[%c1_402, %c1_403, %c0_404], %289 {strides = array<i32>} : memref<2x2x32xf32, #tpu.memory_space<vmem>>, vector<1x1x32xf32>,
    } else {
    }
    return
  }
  func.func @transform_0(%arg0: i32, %arg1: i32, %arg2: i32) -> (i32, i32, i32) {
    %c0_i32 = arith.constant 0 : i32
    return %arg0, %arg1, %arg2 : i32, i32, i32
  }
  func.func @transform_1(%arg0: i32, %arg1: i32, %arg2: i32) -> (i32, i32, i32) {
    %c0_i32 = arith.constant 0 : i32
    return %arg0, %arg1, %arg2 : i32, i32, i32
  }
  func.func @transform_2(%arg0: i32, %arg1: i32, %arg2: i32) -> (i32, i32, i32) {
    %c0_i32 = arith.constant 0 : i32
    %c0_i32_0 = arith.constant 0 : i32
    return %arg0, %c0_i32, %arg1 : i32, i32, i32
  }
}

</mosaic_0001>

<llo_original>
// kernel: tpu_custom_call.1
$region0: #{tpu_custom_call.1}
  #allocation0 [shape = 'u32[]', space=smem, size = 0x4, offset = 0x4, fixed_abs, tag = 'smem constant byte address 0x4 - core index']
  #allocation1 [shape = 'u32[144,128]{1,0:T(1,128)}', space=vmem, size = 0x12000, scoped, tag = 'internal scratch']
  #allocation2 [shape = 'f32[2,32,128]{2,1,0:T(8,128)}', space=vmem, size = 0x8000, scoped, tag = 'scratch operand']
  #allocation3 [shape = 'f32[2,32,128]{2,1,0:T(8,128)}', space=vmem, size = 0x8000, scoped, tag = 'scratch operand']
  %s0 = inlined_call_operand.hbm [shape: f32[2,32,4096], index: 0, kind: input, shape index: {}]
  %s1 = inlined_call_operand.hbm [shape: f32[2,32,4096], index: 1, kind: input, shape index: {}]
  %s2 = inlined_call_operand.hbm [shape: f32[2,2,32], index: 2, kind: output, shape index: {}]
  %s3 = sld [smem:[#allocation0]]
  $region34: #{tpu_custom_call.1} parent=0
    _
  %s5 = ssub.s32 1, %s3
  %s6 = scalar_select 0, %s5, %s3
  $region1: #{tpu_custom_call.1} parent=0
    #allocation4 [shape = 'u8[1048576]{0}', space=vmem, size = 0x100000, scoped, tag = 'input window, operand 0, single buffered']
    #allocation5 [shape = 's32[1]{0}', space=sflag, size = 0x4, scoped, tag = 'scoped memory for tpu_custom_call.1']
    #allocation6 [shape = 's32[1]{0}', space=sflag, size = 0x4, scoped, tag = 'scoped memory for tpu_custom_call.1']
    #allocation7 [shape = 'u8[1048576]{0}', space=vmem, size = 0x100000, scoped, tag = 'input window, operand 1, single buffered']
    #allocation8 [shape = 's32[1]{0}', space=sflag, size = 0x4, scoped, tag = 'scoped memory for tpu_custom_call.1']
    #allocation9 [shape = 'u8[2048]{0}', space=vmem, size = 0x800, scoped, tag = 'output window, operand 0, single buffered']
    %7 = vsyncpa [#allocation5], 0
    %8 = vsyncpa [#allocation8], 0
    %9 = vsyncpa [#allocation6], 0
    // Predicated region
    $region2: #{tpu_custom_call.1} parent=1 // pred_check
      _
    $region3: #{tpu_custom_call.1} parent=1 // pred_check_branch
      %11 = sbr.rel (0) target = $region5
    $region4: #{tpu_custom_call.1} parent=1 // pred_region
      %s13 = ssub.s32 32768, 32768
      %14 = vsyncadd [#allocation5], %s13
      %s15 = sshll.u32 [#allocation4], 4
      %s16 = int_to_ptr.vmem [resolvable:$true] %s15
      %21 = dma.hbm_to_vmem [thread:$0]  %s0, 32768, %s16, [#allocation5], 4096, 4096, 256
    $region5: #{tpu_custom_call.1} parent=1 // pred_fallthru
      _
    // Predicated region
    $region6: #{tpu_custom_call.1} parent=1 // pred_check
      _
    $region7: #{tpu_custom_call.1} parent=1 // pred_check_branch
      %23 = sbr.rel (0) target = $region9
    $region8: #{tpu_custom_call.1} parent=1 // pred_region
      %s25 = ssub.s32 32768, 32768
      %26 = vsyncadd [#allocation8], %s25
      %s27 = sshll.u32 [#allocation7], 4
      %s28 = int_to_ptr.vmem [resolvable:$true] %s27
      %33 = dma.hbm_to_vmem [thread:$0]  %s1, 32768, %s28, [#allocation8], 4096, 4096, 256
    $region9: #{tpu_custom_call.1} parent=1 // pred_fallthru
      _
    // Predicated region
    $region10: #{tpu_custom_call.1} parent=1 // pred_check
      _
    $region11: #{tpu_custom_call.1} parent=1 // pred_check_branch
      %35 = sbr.rel (0) target = $region13
    $region12: #{tpu_custom_call.1} parent=1 // pred_region
      %36 = dma.done [#allocation5], 32768
    $region13: #{tpu_custom_call.1} parent=1 // pred_fallthru
      _
    // Predicated region
    $region14: #{tpu_custom_call.1} parent=1 // pred_check
      _
    $region15: #{tpu_custom_call.1} parent=1 // pred_check_branch
      %38 = sbr.rel (0) target = $region17
    $region16: #{tpu_custom_call.1} parent=1 // pred_region
      %39 = dma.done [#allocation8], 32768
    $region17: #{tpu_custom_call.1} parent=1 // pred_fallthru
      _
    %p40 = scmp.eq.s32.totalorder 0, 0
    // Predicated region
    $region18: #{tpu_custom_call.1} parent=1 // pred_check
      %p41 = pneg %p40
    $region19: #{tpu_custom_call.1} parent=1 // pred_check_branch
      %43 = sbr.rel (%p41) target = $region21
    $region20: #{tpu_custom_call.1} parent=1 // pred_region
      %44 = vst [vmem:[#allocation2] sm:$0xff] 0.0
      %45 = vst [vmem:[#allocation2 + $0x8] sm:$0xff] 0.0
      %46 = vst [vmem:[#allocation2 + $0x10] sm:$0xff] 0.0
      %47 = vst [vmem:[#allocation2 + $0x18] sm:$0xff] 0.0
      %48 = vst [vmem:[#allocation2 + $0x20] sm:$0xff] 0.0
      %49 = vst [vmem:[#allocation2 + $0x28] sm:$0xff] 0.0
      %50 = vst [vmem:[#allocation2 + $0x30] sm:$0xff] 0.0
      %51 = vst [vmem:[#allocation2 + $0x38] sm:$0xff] 0.0
      %52 = vst [vmem:[#allocation3] sm:$0xff] 0.0
      %53 = vst [vmem:[#allocation3 + $0x8] sm:$0xff] 0.0
      %54 = vst [vmem:[#allocation3 + $0x10] sm:$0xff] 0.0
      %55 = vst [vmem:[#allocation3 + $0x18] sm:$0xff] 0.0
      %56 = vst [vmem:[#allocation3 + $0x20] sm:$0xff] 0.0
      %57 = vst [vmem:[#allocation3 + $0x28] sm:$0xff] 0.0
      %58 = vst [vmem:[#allocation3 + $0x30] sm:$0xff] 0.0
      %59 = vst [vmem:[#allocation3 + $0x38] sm:$0xff] 0.0
    $region21: #{tpu_custom_call.1} parent=1 // pred_fallthru
      _
    %v60 = vld [vmem:[#allocation2] sm:$0xff]
    %v61 = vld [vmem:[#allocation2 + $0x8] sm:$0xff]
    %v62 = vld [vmem:[#allocation2 + $0x10] sm:$0xff]
    %v63 = vld [vmem:[#allocation2 + $0x18] sm:$0xff]
    %v64 = vld [vmem:[#allocation3] sm:$0xff]
    %v65 = vld [vmem:[#allocation3 + $0x8] sm:$0xff]
    %v66 = vld [vmem:[#allocation3 + $0x10] sm:$0xff]
    %v67 = vld [vmem:[#allocation3 + $0x18] sm:$0xff]
    %v68 = vld [vmem:[#allocation4] sm:$0xff]
    %v69 = vld [vmem:[#allocation4 + $0x100] sm:$0xff]
    %v70 = vld [vmem:[#allocation4 + $0x200] sm:$0xff]
    %v71 = vld [vmem:[#allocation4 + $0x300] sm:$0xff]
    %v72 = vld [vmem:[#allocation7] sm:$0xff]
    %v73 = vld [vmem:[#allocation7 + $0x100] sm:$0xff]
    %v74 = vld [vmem:[#allocation7 + $0x200] sm:$0xff]
    %v75 = vld [vmem:[#allocation7 + $0x300] sm:$0xff]
    %v76 = vadd.f32 %v60, %v68
    %v77 = vadd.f32 %v61, %v69
    %v78 = vadd.f32 %v62, %v70
    %v79 = vadd.f32 %v63, %v71
    %v80 = vadd.f32 %v64, %v72
    %v81 = vadd.f32 %v65, %v73
    %v82 = vadd.f32 %v66, %v74
    %v83 = vadd.f32 %v67, %v75
    %v84 = vld [vmem:[#allocation4 + $0x8] sm:$0xff]
    %v85 = vld [vmem:[#allocation4 + $0x108] sm:$0xff]
    %v86 = vld [vmem:[#allocation4 + $0x208] sm:$0xff]
    %v87 = vld [vmem:[#allocation4 + $0x308] sm:$0xff]
    %v88 = vld [vmem:[#allocation7 + $0x8] sm:$0xff]
    %v89 = vld [vmem:[#allocation7 + $0x108] sm:$0xff]
    %v90 = vld [vmem:[#allocation7 + $0x208] sm:$0xff]
    %v91 = vld [vmem:[#allocation7 + $0x308] sm:$0xff]
    %v92 = vadd.f32 %v76, %v84
    %v93 = vadd.f32 %v77, %v85
    %v94 = vadd.f32 %v78, %v86
    %v95 = vadd.f32 %v79, %v87
    %v96 = vadd.f32 %v80, %v88
    %v97 = vadd.f32 %v81, %v89
    %v98 = vadd.f32 %v82, %v90
    %v99 = vadd.f32 %v83, %v91
    %v100 = vld [vmem:[#allocation4 + $0x10] sm:$0xff]
    %v101 = vld [vmem:[#allocation4 + $0x110] sm:$0xff]
    %v102 = vld [vmem:[#allocation4 + $0x210] sm:$0xff]
    %v103 = vld [vmem:[#allocation4 + $0x310] sm:$0xff]
    %v104 = vld [vmem:[#allocation7 + $0x10] sm:$0xff]
    %v105 = vld [vmem:[#allocation7 + $0x110] sm:$0xff]
    %v106 = vld [vmem:[#allocation7 + $0x210] sm:$0xff]
    %v107 = vld [vmem:[#allocation7 + $0x310] sm:$0xff]
    %v108 = vadd.f32 %v92, %v100
    %v109 = vadd.f32 %v93, %v101
    %v110 = vadd.f32 %v94, %v102
    %v111 = vadd.f32 %v95, %v103
    %v112 = vadd.f32 %v96, %v104
    %v113 = vadd.f32 %v97, %v105
    %v114 = vadd.f32 %v98, %v106
    %v115 = vadd.f32 %v99, %v107
    %v116 = vld [vmem:[#allocation4 + $0x18] sm:$0xff]
    %v117 = vld [vmem:[#allocation4 + $0x118] sm:$0xff]
    %v118 = vld [vmem:[#allocation4 + $0x218] sm:$0xff]
    %v119 = vld [vmem:[#allocation4 + $0x318] sm:$0xff]
    %v120 = vld [vmem:[#allocation7 + $0x18] sm:$0xff]
    %v121 = vld [vmem:[#allocation7 + $0x118] sm:$0xff]
    %v122 = vld [vmem:[#allocation7 + $0x218] sm:$0xff]
    %v123 = vld [vmem:[#allocation7 + $0x318] sm:$0xff]
    %v124 = vadd.f32 %v108, %v116
    %v125 = vadd.f32 %v109, %v117
    %v126 = vadd.f32 %v110, %v118
    %v127 = vadd.f32 %v111, %v119
    %v128 = vadd.f32 %v112, %v120
    %v129 = vadd.f32 %v113, %v121
    %v130 = vadd.f32 %v114, %v122
    %v131 = vadd.f32 %v115, %v123
    %v132 = vld [vmem:[#allocation4 + $0x20] sm:$0xff]
    %v133 = vld [vmem:[#allocation4 + $0x120] sm:$0xff]
    %v134 = vld [vmem:[#allocation4 + $0x220] sm:$0xff]
    %v135 = vld [vmem:[#allocation4 + $0x320] sm:$0xff]
    %v136 = vld [vmem:[#allocation7 + $0x20] sm:$0xff]
    %v137 = vld [vmem:[#allocation7 + $0x120] sm:$0xff]
    %v138 = vld [vmem:[#allocation7 + $0x220] sm:$0xff]
    %v139 = vld [vmem:[#allocation7 + $0x320] sm:$0xff]
    %v140 = vadd.f32 %v124, %v132
    %v141 = vadd.f32 %v125, %v133
    %v142 = vadd.f32 %v126, %v134
    %v143 = vadd.f32 %v127, %v135
    %v144 = vadd.f32 %v128, %v136
    %v145 = vadd.f32 %v129, %v137
    %v146 = vadd.f32 %v130, %v138
    %v147 = vadd.f32 %v131, %v139
    %v148 = vld [vmem:[#allocation4 + $0x28] sm:$0xff]
    %v149 = vld [vmem:[#allocation4 + $0x128] sm:$0xff]
    %v150 = vld [vmem:[#allocation4 + $0x228] sm:$0xff]
    %v151 = vld [vmem:[#allocation4 + $0x328] sm:$0xff]
    %v152 = vld [vmem:[#allocation7 + $0x28] sm:$0xff]
    %v153 = vld [vmem:[#allocation7 + $0x128] sm:$0xff]
    %v154 = vld [vmem:[#allocation7 + $0x228] sm:$0xff]
    %v155 = vld [vmem:[#allocation7 + $0x328] sm:$0xff]
    %v156 = vadd.f32 %v140, %v148
    %v157 = vadd.f32 %v141, %v149
    %v158 = vadd.f32 %v142, %v150
    %v159 = vadd.f32 %v143, %v151
    %v160 = vadd.f32 %v144, %v152
    %v161 = vadd.f32 %v145, %v153
    %v162 = vadd.f32 %v146, %v154
    %v163 = vadd.f32 %v147, %v155
    %v164 = vld [vmem:[#allocation4 + $0x30] sm:$0xff]
    %v165 = vld [vmem:[#allocation4 + $0x130] sm:$0xff]
    %v166 = vld [vmem:[#allocation4 + $0x230] sm:$0xff]
    %v167 = vld [vmem:[#allocation4 + $0x330] sm:$0xff]
    %v168 = vld [vmem:[#allocation7 + $0x30] sm:$0xff]
    %v169 = vld [vmem:[#allocation7 + $0x130] sm:$0xff]
    %v170 = vld [vmem:[#allocation7 + $0x230] sm:$0xff]
    %v171 = vld [vmem:[#allocation7 + $0x330] sm:$0xff]
    %v172 = vadd.f32 %v156, %v164
    %v173 = vadd.f32 %v157, %v165
    %v174 = vadd.f32 %v158, %v166
    %v175 = vadd.f32 %v159, %v167
    %v176 = vadd.f32 %v160, %v168
    %v177 = vadd.f32 %v161, %v169
    %v178 = vadd.f32 %v162, %v170
    %v179 = vadd.f32 %v163, %v171
    %v180 = vld [vmem:[#allocation4 + $0x38] sm:$0xff]
    %v181 = vld [vmem:[#allocation4 + $0x138] sm:$0xff]
    %v182 = vld [vmem:[#allocation4 + $0x238] sm:$0xff]
    %v183 = vld [vmem:[#allocation4 + $0x338] sm:$0xff]
    %v184 = vld [vmem:[#allocation7 + $0x38] sm:$0xff]
    %v185 = vld [vmem:[#allocation7 + $0x138] sm:$0xff]
    %v186 = vld [vmem:[#allocation7 + $0x238] sm:$0xff]
    %v187 = vld [vmem:[#allocation7 + $0x338] sm:$0xff]
    %v188 = vadd.f32 %v172, %v180
    %v189 = vadd.f32 %v173, %v181
    %v190 = vadd.f32 %v174, %v182
    %v191 = vadd.f32 %v175, %v183
    %v192 = vadd.f32 %v176, %v184
    %v193 = vadd.f32 %v177, %v185
    %v194 = vadd.f32 %v178, %v186
    %v195 = vadd.f32 %v179, %v187
    %v196 = vld [vmem:[#allocation4 + $0x40] sm:$0xff]
    %v197 = vld [vmem:[#allocation4 + $0x140] sm:$0xff]
    %v198 = vld [vmem:[#allocation4 + $0x240] sm:$0xff]
    %v199 = vld [vmem:[#allocation4 + $0x340] sm:$0xff]
    %v200 = vld [vmem:[#allocation7 + $0x40] sm:$0xff]
    %v201 = vld [vmem:[#allocation7 + $0x140] sm:$0xff]
    %v202 = vld [vmem:[#allocation7 + $0x240] sm:$0xff]
    %v203 = vld [vmem:[#allocation7 + $0x340] sm:$0xff]
    %v204 = vadd.f32 %v188, %v196
    %v205 = vadd.f32 %v189, %v197
    %v206 = vadd.f32 %v190, %v198
    %v207 = vadd.f32 %v191, %v199
    %v208 = vadd.f32 %v192, %v200
    %v209 = vadd.f32 %v193, %v201
    %v210 = vadd.f32 %v194, %v202
    %v211 = vadd.f32 %v195, %v203
    %v212 = vld [vmem:[#allocation4 + $0x48] sm:$0xff]
    %v213 = vld [vmem:[#allocation4 + $0x148] sm:$0xff]
    %v214 = vld [vmem:[#allocation4 + $0x248] sm:$0xff]
    %v215 = vld [vmem:[#allocation4 + $0x348] sm:$0xff]
    %v216 = vld [vmem:[#allocation7 + $0x48] sm:$0xff]
    %v217 = vld [vmem:[#allocation7 + $0x148] sm:$0xff]
    %v218 = vld [vmem:[#allocation7 + $0x248] sm:$0xff]
    %v219 = vld [vmem:[#allocation7 + $0x348] sm:$0xff]
    %v220 = vadd.f32 %v204, %v212
    %v221 = vadd.f32 %v205, %v213
    %v222 = vadd.f32 %v206, %v214
    %v223 = vadd.f32 %v207, %v215
    %v224 = vadd.f32 %v208, %v216
    %v225 = vadd.f32 %v209, %v217
    %v226 = vadd.f32 %v210, %v218
    %v227 = vadd.f32 %v211, %v219
    %v228 = vld [vmem:[#allocation4 + $0x50] sm:$0xff]
    %v229 = vld [vmem:[#allocation4 + $0x150] sm:$0xff]
    %v230 = vld [vmem:[#allocation4 + $0x250] sm:$0xff]
    %v231 = vld [vmem:[#allocation4 + $0x350] sm:$0xff]
    %v232 = vld [vmem:[#allocation7 + $0x50] sm:$0xff]
    %v233 = vld [vmem:[#allocation7 + $0x150] sm:$0xff]
    %v234 = vld [vmem:[#allocation7 + $0x250] sm:$0xff]
    %v235 = vld [vmem:[#allocation7 + $0x350] sm:$0xff]
    %v236 = vadd.f32 %v220, %v228
    %v237 = vadd.f32 %v221, %v229
    %v238 = vadd.f32 %v222, %v230
    %v239 = vadd.f32 %v223, %v231
    %v240 = vadd.f32 %v224, %v232
    %v241 = vadd.f32 %v225, %v233
    %v242 = vadd.f32 %v226, %v234
    %v243 = vadd.f32 %v227, %v235
    %v244 = vld [vmem:[#allocation4 + $0x58] sm:$0xff]
    %v245 = vld [vmem:[#allocation4 + $0x158] sm:$0xff]
    %v246 = vld [vmem:[#allocation4 + $0x258] sm:$0xff]
    %v247 = vld [vmem:[#allocation4 + $0x358] sm:$0xff]
    %v248 = vld [vmem:[#allocation7 + $0x58] sm:$0xff]
    %v249 = vld [vmem:[#allocation7 + $0x158] sm:$0xff]
    %v250 = vld [vmem:[#allocation7 + $0x258] sm:$0xff]
    %v251 = vld [vmem:[#allocation7 + $0x358] sm:$0xff]
    %v252 = vadd.f32 %v236, %v244
    %v253 = vadd.f32 %v237, %v245
    %v254 = vadd.f32 %v238, %v246
    %v255 = vadd.f32 %v239, %v247
    %v256 = vadd.f32 %v240, %v248
    %v257 = vadd.f32 %v241, %v249
    %v258 = vadd.f32 %v242, %v250
    %v259 = vadd.f32 %v243, %v251
    %v260 = vld [vmem:[#allocation4 + $0x60] sm:$0xff]
    %v261 = vld [vmem:[#allocation4 + $0x160] sm:$0xff]
    %v262 = vld [vmem:[#allocation4 + $0x260] sm:$0xff]
    %v263 = vld [vmem:[#allocation4 + $0x360] sm:$0xff]
    %v264 = vld [vmem:[#allocation7 + $0x60] sm:$0xff]
    %v265 = vld [vmem:[#allocation7 + $0x160] sm:$0xff]
    %v266 = vld [vmem:[#allocation7 + $0x260] sm:$0xff]
    %v267 = vld [vmem:[#allocation7 + $0x360] sm:$0xff]
    %v268 = vadd.f32 %v252, %v260
    %v269 = vadd.f32 %v253, %v261
    %v270 = vadd.f32 %v254, %v262
    %v271 = vadd.f32 %v255, %v263
    %v272 = vadd.f32 %v256, %v264
    %v273 = vadd.f32 %v257, %v265
    %v274 = vadd.f32 %v258, %v266
    %v275 = vadd.f32 %v259, %v267
    %v276 = vld [vmem:[#allocation4 + $0x68] sm:$0xff]
    %v277 = vld [vmem:[#allocation4 + $0x168] sm:$0xff]
    %v278 = vld [vmem:[#allocation4 + $0x268] sm:$0xff]
    %v279 = vld [vmem:[#allocation4 + $0x368] sm:$0xff]
    %v280 = vld [vmem:[#allocation7 + $0x68] sm:$0xff]
    %v281 = vld [vmem:[#allocation7 + $0x168] sm:$0xff]
    %v282 = vld [vmem:[#allocation7 + $0x268] sm:$0xff]
    %v283 = vld [vmem:[#allocation7 + $0x368] sm:$0xff]
    %v284 = vadd.f32 %v268, %v276
    %v285 = vadd.f32 %v269, %v277
    %v286 = vadd.f32 %v270, %v278
    %v287 = vadd.f32 %v271, %v279
    %v288 = vadd.f32 %v272, %v280
    %v289 = vadd.f32 %v273, %v281
    %v290 = vadd.f32 %v274, %v282
    %v291 = vadd.f32 %v275, %v283
    %v292 = vld [vmem:[#allocation4 + $0x70] sm:$0xff]
    %v293 = vld [vmem:[#allocation4 + $0x170] sm:$0xff]
    %v294 = vld [vmem:[#allocation4 + $0x270] sm:$0xff]
    %v295 = vld [vmem:[#allocation4 + $0x370] sm:$0xff]
    %v296 = vld [vmem:[#allocation7 + $0x70] sm:$0xff]
    %v297 = vld [vmem:[#allocation7 + $0x170] sm:$0xff]
    %v298 = vld [vmem:[#allocation7 + $0x270] sm:$0xff]
    %v299 = vld [vmem:[#allocation7 + $0x370] sm:$0xff]
    %v300 = vadd.f32 %v284, %v292
    %v301 = vadd.f32 %v285, %v293
    %v302 = vadd.f32 %v286, %v294
    %v303 = vadd.f32 %v287, %v295
    %v304 = vadd.f32 %v288, %v296
    %v305 = vadd.f32 %v289, %v297
    %v306 = vadd.f32 %v290, %v298
    %v307 = vadd.f32 %v291, %v299
    %v308 = vld [vmem:[#allocation4 + $0x78] sm:$0xff]
    %v309 = vld [vmem:[#allocation4 + $0x178] sm:$0xff]
    %v310 = vld [vmem:[#allocation4 + $0x278] sm:$0xff]
    %v311 = vld [vmem:[#allocation4 + $0x378] sm:$0xff]
    %v312 = vld [vmem:[#allocation7 + $0x78] sm:$0xff]
    %v313 = vld [vmem:[#allocation7 + $0x178] sm:$0xff]
    %v314 = vld [vmem:[#allocation7 + $0x278] sm:$0xff]
    %v315 = vld [vmem:[#allocation7 + $0x378] sm:$0xff]
    %v316 = vadd.f32 %v300, %v308
    %v317 = vadd.f32 %v301, %v309
    %v318 = vadd.f32 %v302, %v310
    %v319 = vadd.f32 %v303, %v311
    %v320 = vadd.f32 %v304, %v312
    %v321 = vadd.f32 %v305, %v313
    %v322 = vadd.f32 %v306, %v314
    %v323 = vadd.f32 %v307, %v315
    %v324 = vld [vmem:[#allocation4 + $0x80] sm:$0xff]
    %v325 = vld [vmem:[#allocation4 + $0x180] sm:$0xff]
    %v326 = vld [vmem:[#allocation4 + $0x280] sm:$0xff]
    %v327 = vld [vmem:[#allocation4 + $0x380] sm:$0xff]
    %v328 = vld [vmem:[#allocation7 + $0x80] sm:$0xff]
    %v329 = vld [vmem:[#allocation7 + $0x180] sm:$0xff]
    %v330 = vld [vmem:[#allocation7 + $0x280] sm:$0xff]
    %v331 = vld [vmem:[#allocation7 + $0x380] sm:$0xff]
    %v332 = vadd.f32 %v316, %v324
    %v333 = vadd.f32 %v317, %v325
    %v334 = vadd.f32 %v318, %v326
    %v335 = vadd.f32 %v319, %v327
    %v336 = vadd.f32 %v320, %v328
    %v337 = vadd.f32 %v321, %v329
    %v338 = vadd.f32 %v322, %v330
    %v339 = vadd.f32 %v323, %v331
    %v340 = vld [vmem:[#allocation4 + $0x88] sm:$0xff]
    %v341 = vld [vmem:[#allocation4 + $0x188] sm:$0xff]
    %v342 = vld [vmem:[#allocation4 + $0x288] sm:$0xff]
    %v343 = vld [vmem:[#allocation4 + $0x388] sm:$0xff]
    %v344 = vld [vmem:[#allocation7 + $0x88] sm:$0xff]
    %v345 = vld [vmem:[#allocation7 + $0x188] sm:$0xff]
    %v346 = vld [vmem:[#allocation7 + $0x288] sm:$0xff]
    %v347 = vld [vmem:[#allocation7 + $0x388] sm:$0xff]
    %v348 = vadd.f32 %v332, %v340
    %v349 = vadd.f32 %v333, %v341
    %v350 = vadd.f32 %v334, %v342
    %v351 = vadd.f32 %v335, %v343
    %v352 = vadd.f32 %v336, %v344
    %v353 = vadd.f32 %v337, %v345
    %v354 = vadd.f32 %v338, %v346
    %v355 = vadd.f32 %v339, %v347
    %v356 = vld [vmem:[#allocation4 + $0x90] sm:$0xff]
    %v357 = vld [vmem:[#allocation4 + $0x190] sm:$0xff]
    %v358 = vld [vmem:[#allocation4 + $0x290] sm:$0xff]
    %v359 = vld [vmem:[#allocation4 + $0x390] sm:$0xff]
    %v360 = vld [vmem:[#allocation7 + $0x90] sm:$0xff]
    %v361 = vld [vmem:[#allocation7 + $0x190] sm:$0xff]
    %v362 = vld [vmem:[#allocation7 + $0x290] sm:$0xff]
    %v363 = vld [vmem:[#allocation7 + $0x390] sm:$0xff]
    %v364 = vadd.f32 %v348, %v356
    %v365 = vadd.f32 %v349, %v357
    %v366 = vadd.f32 %v350, %v358
    %v367 = vadd.f32 %v351, %v359
    %v368 = vadd.f32 %v352, %v360
    %v369 = vadd.f32 %v353, %v361
    %v370 = vadd.f32 %v354, %v362
    %v371 = vadd.f32 %v355, %v363
    %v372 = vld [vmem:[#allocation4 + $0x98] sm:$0xff]
    %v373 = vld [vmem:[#allocation4 + $0x198] sm:$0xff]
    %v374 = vld [vmem:[#allocation4 + $0x298] sm:$0xff]
    %v375 = vld [vmem:[#allocation4 + $0x398] sm:$0xff]
    %v376 = vld [vmem:[#allocation7 + $0x98] sm:$0xff]
    %v377 = vld [vmem:[#allocation7 + $0x198] sm:$0xff]
    %v378 = vld [vmem:[#allocation7 + $0x298] sm:$0xff]
    %v379 = vld [vmem:[#allocation7 + $0x398] sm:$0xff]
    %v380 = vadd.f32 %v364, %v372
    %v381 = vadd.f32 %v365, %v373
    %v382 = vadd.f32 %v366, %v374
    %v383 = vadd.f32 %v367, %v375
    %v384 = vadd.f32 %v368, %v376
    %v385 = vadd.f32 %v369, %v377
    %v386 = vadd.f32 %v370, %v378
    %v387 = vadd.f32 %v371, %v379
    %v388 = vld [vmem:[#allocation4 + $0xa0] sm:$0xff]
    %v389 = vld [vmem:[#allocation4 + $0x1a0] sm:$0xff]
    %v390 = vld [vmem:[#allocation4 + $0x2a0] sm:$0xff]
    %v391 = vld [vmem:[#allocation4 + $0x3a0] sm:$0xff]
    %v392 = vld [vmem:[#allocation7 + $0xa0] sm:$0xff]
    %v393 = vld [vmem:[#allocation7 + $0x1a0] sm:$0xff]
    %v394 = vld [vmem:[#allocation7 + $0x2a0] sm:$0xff]
    %v395 = vld [vmem:[#allocation7 + $0x3a0] sm:$0xff]
    %v396 = vadd.f32 %v380, %v388
    %v397 = vadd.f32 %v381, %v389
    %v398 = vadd.f32 %v382, %v390
    %v399 = vadd.f32 %v383, %v391
    %v400 = vadd.f32 %v384, %v392
    %v401 = vadd.f32 %v385, %v393
    %v402 = vadd.f32 %v386, %v394
    %v403 = vadd.f32 %v387, %v395
    %v404 = vld [vmem:[#allocation4 + $0xa8] sm:$0xff]
    %v405 = vld [vmem:[#allocation4 + $0x1a8] sm:$0xff]
    %v406 = vld [vmem:[#allocation4 + $0x2a8] sm:$0xff]
    %v407 = vld [vmem:[#allocation4 + $0x3a8] sm:$0xff]
    %v408 = vld [vmem:[#allocation7 + $0xa8] sm:$0xff]
    %v409 = vld [vmem:[#allocation7 + $0x1a8] sm:$0xff]
    %v410 = vld [vmem:[#allocation7 + $0x2a8] sm:$0xff]
    %v411 = vld [vmem:[#allocation7 + $0x3a8] sm:$0xff]
    %v412 = vadd.f32 %v396, %v404
    %v413 = vadd.f32 %v397, %v405
    %v414 = vadd.f32 %v398, %v406
    %v415 = vadd.f32 %v399, %v407
    %v416 = vadd.f32 %v400, %v408
    %v417 = vadd.f32 %v401, %v409
    %v418 = vadd.f32 %v402, %v410
    %v419 = vadd.f32 %v403, %v411
    %v420 = vld [vmem:[#allocation4 + $0xb0] sm:$0xff]
    %v421 = vld [vmem:[#allocation4 + $0x1b0] sm:$0xff]
    %v422 = vld [vmem:[#allocation4 + $0x2b0] sm:$0xff]
    %v423 = vld [vmem:[#allocation4 + $0x3b0] sm:$0xff]
    %v424 = vld [vmem:[#allocation7 + $0xb0] sm:$0xff]
    %v425 = vld [vmem:[#allocation7 + $0x1b0] sm:$0xff]
    %v426 = vld [vmem:[#allocation7 + $0x2b0] sm:$0xff]
    %v427 = vld [vmem:[#allocation7 + $0x3b0] sm:$0xff]
    %v428 = vadd.f32 %v412, %v420
    %v429 = vadd.f32 %v413, %v421
    %v430 = vadd.f32 %v414, %v422
    %v431 = vadd.f32 %v415, %v423
    %v432 = vadd.f32 %v416, %v424
    %v433 = vadd.f32 %v417, %v425
    %v434 = vadd.f32 %v418, %v426
    %v435 = vadd.f32 %v419, %v427
    %v436 = vld [vmem:[#allocation4 + $0xb8] sm:$0xff]
    %v437 = vld [vmem:[#allocation4 + $0x1b8] sm:$0xff]
    %v438 = vld [vmem:[#allocation4 + $0x2b8] sm:$0xff]
    %v439 = vld [vmem:[#allocation4 + $0x3b8] sm:$0xff]
    %v440 = vld [vmem:[#allocation7 + $0xb8] sm:$0xff]
    %v441 = vld [vmem:[#allocation7 + $0x1b8] sm:$0xff]
    %v442 = vld [vmem:[#allocation7 + $0x2b8] sm:$0xff]
    %v443 = vld [vmem:[#allocation7 + $0x3b8] sm:$0xff]
    %v444 = vadd.f32 %v428, %v436
    %v445 = vadd.f32 %v429, %v437
    %v446 = vadd.f32 %v430, %v438
    %v447 = vadd.f32 %v431, %v439
    %v448 = vadd.f32 %v432, %v440
    %v449 = vadd.f32 %v433, %v441
    %v450 = vadd.f32 %v434, %v442
    %v451 = vadd.f32 %v435, %v443
    %v452 = vld [vmem:[#allocation4 + $0xc0] sm:$0xff]
    %v453 = vld [vmem:[#allocation4 + $0x1c0] sm:$0xff]
    %v454 = vld [vmem:[#allocation4 + $0x2c0] sm:$0xff]
    %v455 = vld [vmem:[#allocation4 + $0x3c0] sm:$0xff]
    %v456 = vld [vmem:[#allocation7 + $0xc0] sm:$0xff]
    %v457 = vld [vmem:[#allocation7 + $0x1c0] sm:$0xff]
    %v458 = vld [vmem:[#allocation7 + $0x2c0] sm:$0xff]
    %v459 = vld [vmem:[#allocation7 + $0x3c0] sm:$0xff]
    %v460 = vadd.f32 %v444, %v452
    %v461 = vadd.f32 %v445, %v453
    %v462 = vadd.f32 %v446, %v454
    %v463 = vadd.f32 %v447, %v455
    %v464 = vadd.f32 %v448, %v456
    %v465 = vadd.f32 %v449, %v457
    %v466 = vadd.f32 %v450, %v458
    %v467 = vadd.f32 %v451, %v459
    %v468 = vld [vmem:[#allocation4 + $0xc8] sm:$0xff]
    %v469 = vld [vmem:[#allocation4 + $0x1c8] sm:$0xff]
    %v470 = vld [vmem:[#allocation4 + $0x2c8] sm:$0xff]
    %v471 = vld [vmem:[#allocation4 + $0x3c8] sm:$0xff]
    %v472 = vld [vmem:[#allocation7 + $0xc8] sm:$0xff]
    %v473 = vld [vmem:[#allocation7 + $0x1c8] sm:$0xff]
    %v474 = vld [vmem:[#allocation7 + $0x2c8] sm:$0xff]
    %v475 = vld [vmem:[#allocation7 + $0x3c8] sm:$0xff]
    %v476 = vadd.f32 %v460, %v468
    %v477 = vadd.f32 %v461, %v469
    %v478 = vadd.f32 %v462, %v470
    %v479 = vadd.f32 %v463, %v471
    %v480 = vadd.f32 %v464, %v472
    %v481 = vadd.f32 %v465, %v473
    %v482 = vadd.f32 %v466, %v474
    %v483 = vadd.f32 %v467, %v475
    %v484 = vld [vmem:[#allocation4 + $0xd0] sm:$0xff]
    %v485 = vld [vmem:[#allocation4 + $0x1d0] sm:$0xff]
    %v486 = vld [vmem:[#allocation4 + $0x2d0] sm:$0xff]
    %v487 = vld [vmem:[#allocation4 + $0x3d0] sm:$0xff]
    %v488 = vld [vmem:[#allocation7 + $0xd0] sm:$0xff]
    %v489 = vld [vmem:[#allocation7 + $0x1d0] sm:$0xff]
    %v490 = vld [vmem:[#allocation7 + $0x2d0] sm:$0xff]
    %v491 = vld [vmem:[#allocation7 + $0x3d0] sm:$0xff]
    %v492 = vadd.f32 %v476, %v484
    %v493 = vadd.f32 %v477, %v485
    %v494 = vadd.f32 %v478, %v486
    %v495 = vadd.f32 %v479, %v487
    %v496 = vadd.f32 %v480, %v488
    %v497 = vadd.f32 %v481, %v489
    %v498 = vadd.f32 %v482, %v490
    %v499 = vadd.f32 %v483, %v491
    %v500 = vld [vmem:[#allocation4 + $0xd8] sm:$0xff]
    %v501 = vld [vmem:[#allocation4 + $0x1d8] sm:$0xff]
    %v502 = vld [vmem:[#allocation4 + $0x2d8] sm:$0xff]
    %v503 = vld [vmem:[#allocation4 + $0x3d8] sm:$0xff]
    %v504 = vld [vmem:[#allocation7 + $0xd8] sm:$0xff]
    %v505 = vld [vmem:[#allocation7 + $0x1d8] sm:$0xff]
    %v506 = vld [vmem:[#allocation7 + $0x2d8] sm:$0xff]
    %v507 = vld [vmem:[#allocation7 + $0x3d8] sm:$0xff]
    %v508 = vadd.f32 %v492, %v500
    %v509 = vadd.f32 %v493, %v501
    %v510 = vadd.f32 %v494, %v502
    %v511 = vadd.f32 %v495, %v503
    %v512 = vadd.f32 %v496, %v504
    %v513 = vadd.f32 %v497, %v505
    %v514 = vadd.f32 %v498, %v506
    %v515 = vadd.f32 %v499, %v507
    %v516 = vld [vmem:[#allocation4 + $0xe0] sm:$0xff]
    %v517 = vld [vmem:[#allocation4 + $0x1e0] sm:$0xff]
    %v518 = vld [vmem:[#allocation4 + $0x2e0] sm:$0xff]
    %v519 = vld [vmem:[#allocation4 + $0x3e0] sm:$0xff]
    %v520 = vld [vmem:[#allocation7 + $0xe0] sm:$0xff]
    %v521 = vld [vmem:[#allocation7 + $0x1e0] sm:$0xff]
    %v522 = vld [vmem:[#allocation7 + $0x2e0] sm:$0xff]
    %v523 = vld [vmem:[#allocation7 + $0x3e0] sm:$0xff]
    %v524 = vadd.f32 %v508, %v516
    %v525 = vadd.f32 %v509, %v517
    %v526 = vadd.f32 %v510, %v518
    %v527 = vadd.f32 %v511, %v519
    %v528 = vadd.f32 %v512, %v520
    %v529 = vadd.f32 %v513, %v521
    %v530 = vadd.f32 %v514, %v522
    %v531 = vadd.f32 %v515, %v523
    %v532 = vld [vmem:[#allocation4 + $0xe8] sm:$0xff]
    %v533 = vld [vmem:[#allocation4 + $0x1e8] sm:$0xff]
    %v534 = vld [vmem:[#allocation4 + $0x2e8] sm:$0xff]
    %v535 = vld [vmem:[#allocation4 + $0x3e8] sm:$0xff]
    %v536 = vld [vmem:[#allocation7 + $0xe8] sm:$0xff]
    %v537 = vld [vmem:[#allocation7 + $0x1e8] sm:$0xff]
    %v538 = vld [vmem:[#allocation7 + $0x2e8] sm:$0xff]
    %v539 = vld [vmem:[#allocation7 + $0x3e8] sm:$0xff]
    %v540 = vadd.f32 %v524, %v532
    %v541 = vadd.f32 %v525, %v533
    %v542 = vadd.f32 %v526, %v534
    %v543 = vadd.f32 %v527, %v535
    %v544 = vadd.f32 %v528, %v536
    %v545 = vadd.f32 %v529, %v537
    %v546 = vadd.f32 %v530, %v538
    %v547 = vadd.f32 %v531, %v539
    %v548 = vld [vmem:[#allocation4 + $0xf0] sm:$0xff]
    %v549 = vld [vmem:[#allocation4 + $0x1f0] sm:$0xff]
    %v550 = vld [vmem:[#allocation4 + $0x2f0] sm:$0xff]
    %v551 = vld [vmem:[#allocation4 + $0x3f0] sm:$0xff]
    %v552 = vld [vmem:[#allocation7 + $0xf0] sm:$0xff]
    %v553 = vld [vmem:[#allocation7 + $0x1f0] sm:$0xff]
    %v554 = vld [vmem:[#allocation7 + $0x2f0] sm:$0xff]
    %v555 = vld [vmem:[#allocation7 + $0x3f0] sm:$0xff]
    %v556 = vadd.f32 %v540, %v548
    %v557 = vadd.f32 %v541, %v549
    %v558 = vadd.f32 %v542, %v550
    %v559 = vadd.f32 %v543, %v551
    %v560 = vadd.f32 %v544, %v552
    %v561 = vadd.f32 %v545, %v553
    %v562 = vadd.f32 %v546, %v554
    %v563 = vadd.f32 %v547, %v555
    %v564 = vld [vmem:[#allocation4 + $0xf8] sm:$0xff]
    %v565 = vld [vmem:[#allocation4 + $0x1f8] sm:$0xff]
    %v566 = vld [vmem:[#allocation4 + $0x2f8] sm:$0xff]
    %v567 = vld [vmem:[#allocation4 + $0x3f8] sm:$0xff]
    %v568 = vld [vmem:[#allocation7 + $0xf8] sm:$0xff]
    %v569 = vld [vmem:[#allocation7 + $0x1f8] sm:$0xff]
    %v570 = vld [vmem:[#allocation7 + $0x2f8] sm:$0xff]
    %v571 = vld [vmem:[#allocation7 + $0x3f8] sm:$0xff]
    %v572 = vadd.f32 %v556, %v564
    %v573 = vadd.f32 %v557, %v565
    %v574 = vadd.f32 %v558, %v566
    %v575 = vadd.f32 %v559, %v567
    %v576 = vadd.f32 %v560, %v568
    %v577 = vadd.f32 %v561, %v569
    %v578 = vadd.f32 %v562, %v570
    %v579 = vadd.f32 %v563, %v571
    %580 = vst [vmem:[#allocation2] sm:$0xff] %v572
    %581 = vst [vmem:[#allocation2 + $0x8] sm:$0xff] %v573
    %582 = vst [vmem:[#allocation2 + $0x10] sm:$0xff] %v574
    %583 = vst [vmem:[#allocation2 + $0x18] sm:$0xff] %v575
    %584 = vst [vmem:[#allocation3] sm:$0xff] %v576
    %585 = vst [vmem:[#allocation3 + $0x8] sm:$0xff] %v577
    %586 = vst [vmem:[#allocation3 + $0x10] sm:$0xff] %v578
    %587 = vst [vmem:[#allocation3 + $0x18] sm:$0xff] %v579
    %s588 = scalar_lea.vmem [#allocation2], 32
    %v589 = vld [vmem:[%s588] sm:$0xff]
    %v590 = vld [vmem:[%s588 + $0x8] sm:$0xff]
    %v591 = vld [vmem:[%s588 + $0x10] sm:$0xff]
    %v592 = vld [vmem:[%s588 + $0x18] sm:$0xff]
    %s593 = scalar_lea.vmem [#allocation3], 32
    %v594 = vld [vmem:[%s593] sm:$0xff]
    %v595 = vld [vmem:[%s593 + $0x8] sm:$0xff]
    %v596 = vld [vmem:[%s593 + $0x10] sm:$0xff]
    %v597 = vld [vmem:[%s593 + $0x18] sm:$0xff]
    %s598 = scalar_lea.vmem [#allocation4], 1024
    %v599 = vld [vmem:[%s598] sm:$0xff]
    %v600 = vld [vmem:[%s598 + $0x100] sm:$0xff]
    %v601 = vld [vmem:[%s598 + $0x200] sm:$0xff]
    %v602 = vld [vmem:[%s598 + $0x300] sm:$0xff]
    %s603 = scalar_lea.vmem [#allocation7], 1024
    %v604 = vld [vmem:[%s603] sm:$0xff]
    %v605 = vld [vmem:[%s603 + $0x100] sm:$0xff]
    %v606 = vld [vmem:[%s603 + $0x200] sm:$0xff]
    %v607 = vld [vmem:[%s603 + $0x300] sm:$0xff]
    %v608 = vadd.f32 %v589, %v599
    %v609 = vadd.f32 %v590, %v600
    %v610 = vadd.f32 %v591, %v601
    %v611 = vadd.f32 %v592, %v602
    %v612 = vadd.f32 %v594, %v604
    %v613 = vadd.f32 %v595, %v605
    %v614 = vadd.f32 %v596, %v606
    %v615 = vadd.f32 %v597, %v607
    %v616 = vld [vmem:[%s598 + $0x8] sm:$0xff]
    %v617 = vld [vmem:[%s598 + $0x108] sm:$0xff]
    %v618 = vld [vmem:[%s598 + $0x208] sm:$0xff]
    %v619 = vld [vmem:[%s598 + $0x308] sm:$0xff]
    %v620 = vld [vmem:[%s603 + $0x8] sm:$0xff]
    %v621 = vld [vmem:[%s603 + $0x108] sm:$0xff]
    %v622 = vld [vmem:[%s603 + $0x208] sm:$0xff]
    %v623 = vld [vmem:[%s603 + $0x308] sm:$0xff]
    %v624 = vadd.f32 %v608, %v616
    %v625 = vadd.f32 %v609, %v617
    %v626 = vadd.f32 %v610, %v618
    %v627 = vadd.f32 %v611, %v619
    %v628 = vadd.f32 %v612, %v620
    %v629 = vadd.f32 %v613, %v621
    %v630 = vadd.f32 %v614, %v622
    %v631 = vadd.f32 %v615, %v623
    %v632 = vld [vmem:[%s598 + $0x10] sm:$0xff]
    %v633 = vld [vmem:[%s598 + $0x110] sm:$0xff]
    %v634 = vld [vmem:[%s598 + $0x210] sm:$0xff]
    %v635 = vld [vmem:[%s598 + $0x310] sm:$0xff]
    %v636 = vld [vmem:[%s603 + $0x10] sm:$0xff]
    %v637 = vld [vmem:[%s603 + $0x110] sm:$0xff]
    %v638 = vld [vmem:[%s603 + $0x210] sm:$0xff]
    %v639 = vld [vmem:[%s603 + $0x310] sm:$0xff]
    %v640 = vadd.f32 %v624, %v632
    %v641 = vadd.f32 %v625, %v633
    %v642 = vadd.f32 %v626, %v634
    %v643 = vadd.f32 %v627, %v635
    %v644 = vadd.f32 %v628, %v636
    %v645 = vadd.f32 %v629, %v637
    %v646 = vadd.f32 %v630, %v638
    %v647 = vadd.f32 %v631, %v639
    %v648 = vld [vmem:[%s598 + $0x18] sm:$0xff]
    %v649 = vld [vmem:[%s598 + $0x118] sm:$0xff]
    %v650 = vld [vmem:[%s598 + $0x218] sm:$0xff]
    %v651 = vld [vmem:[%s598 + $0x318] sm:$0xff]
    %v652 = vld [vmem:[%s603 + $0x18] sm:$0xff]
    %v653 = vld [vmem:[%s603 + $0x118] sm:$0xff]
    %v654 = vld [vmem:[%s603 + $0x218] sm:$0xff]
    %v655 = vld [vmem:[%s603 + $0x318] sm:$0xff]
    %v656 = vadd.f32 %v640, %v648
    %v657 = vadd.f32 %v641, %v649
    %v658 = vadd.f32 %v642, %v650
    %v659 = vadd.f32 %v643, %v651
    %v660 = vadd.f32 %v644, %v652
    %v661 = vadd.f32 %v645, %v653
    %v662 = vadd.f32 %v646, %v654
    %v663 = vadd.f32 %v647, %v655
    %v664 = vld [vmem:[%s598 + $0x20] sm:$0xff]
    %v665 = vld [vmem:[%s598 + $0x120] sm:$0xff]
    %v666 = vld [vmem:[%s598 + $0x220] sm:$0xff]
    %v667 = vld [vmem:[%s598 + $0x320] sm:$0xff]
    %v668 = vld [vmem:[%s603 + $0x20] sm:$0xff]
    %v669 = vld [vmem:[%s603 + $0x120] sm:$0xff]
    %v670 = vld [vmem:[%s603 + $0x220] sm:$0xff]
    %v671 = vld [vmem:[%s603 + $0x320] sm:$0xff]
    %v672 = vadd.f32 %v656, %v664
    %v673 = vadd.f32 %v657, %v665
    %v674 = vadd.f32 %v658, %v666
    %v675 = vadd.f32 %v659, %v667
    %v676 = vadd.f32 %v660, %v668
    %v677 = vadd.f32 %v661, %v669
    %v678 = vadd.f32 %v662, %v670
    %v679 = vadd.f32 %v663, %v671
    %v680 = vld [vmem:[%s598 + $0x28] sm:$0xff]
    %v681 = vld [vmem:[%s598 + $0x128] sm:$0xff]
    %v682 = vld [vmem:[%s598 + $0x228] sm:$0xff]
    %v683 = vld [vmem:[%s598 + $0x328] sm:$0xff]
    %v684 = vld [vmem:[%s603 + $0x28] sm:$0xff]
    %v685 = vld [vmem:[%s603 + $0x128] sm:$0xff]
    %v686 = vld [vmem:[%s603 + $0x228] sm:$0xff]
    %v687 = vld [vmem:[%s603 + $0x328] sm:$0xff]
    %v688 = vadd.f32 %v672, %v680
    %v689 = vadd.f32 %v673, %v681
    %v690 = vadd.f32 %v674, %v682
    %v691 = vadd.f32 %v675, %v683
    %v692 = vadd.f32 %v676, %v684
    %v693 = vadd.f32 %v677, %v685
    %v694 = vadd.f32 %v678, %v686
    %v695 = vadd.f32 %v679, %v687
    %v696 = vld [vmem:[%s598 + $0x30] sm:$0xff]
    %v697 = vld [vmem:[%s598 + $0x130] sm:$0xff]
    %v698 = vld [vmem:[%s598 + $0x230] sm:$0xff]
    %v699 = vld [vmem:[%s598 + $0x330] sm:$0xff]
    %v700 = vld [vmem:[%s603 + $0x30] sm:$0xff]
    %v701 = vld [vmem:[%s603 + $0x130] sm:$0xff]
    %v702 = vld [vmem:[%s603 + $0x230] sm:$0xff]
    %v703 = vld [vmem:[%s603 + $0x330] sm:$0xff]
    %v704 = vadd.f32 %v688, %v696
    %v705 = vadd.f32 %v689, %v697
    %v706 = vadd.f32 %v690, %v698
    %v707 = vadd.f32 %v691, %v699
    %v708 = vadd.f32 %v692, %v700
    %v709 = vadd.f32 %v693, %v701
    %v710 = vadd.f32 %v694, %v702
    %v711 = vadd.f32 %v695, %v703
    %v712 = vld [vmem:[%s598 + $0x38] sm:$0xff]
    %v713 = vld [vmem:[%s598 + $0x138] sm:$0xff]
    %v714 = vld [vmem:[%s598 + $0x238] sm:$0xff]
    %v715 = vld [vmem:[%s598 + $0x338] sm:$0xff]
    %v716 = vld [vmem:[%s603 + $0x38] sm:$0xff]
    %v717 = vld [vmem:[%s603 + $0x138] sm:$0xff]
    %v718 = vld [vmem:[%s603 + $0x238] sm:$0xff]
    %v719 = vld [vmem:[%s603 + $0x338] sm:$0xff]
    %v720 = vadd.f32 %v704, %v712
    %v721 = vadd.f32 %v705, %v713
    %v722 = vadd.f32 %v706, %v714
    %v723 = vadd.f32 %v707, %v715
    %v724 = vadd.f32 %v708, %v716
    %v725 = vadd.f32 %v709, %v717
    %v726 = vadd.f32 %v710, %v718
    %v727 = vadd.f32 %v711, %v719
    %v728 = vld [vmem:[%s598 + $0x40] sm:$0xff]
    %v729 = vld [vmem:[%s598 + $0x140] sm:$0xff]
    %v730 = vld [vmem:[%s598 + $0x240] sm:$0xff]
    %v731 = vld [vmem:[%s598 + $0x340] sm:$0xff]
    %v732 = vld [vmem:[%s603 + $0x40] sm:$0xff]
    %v733 = vld [vmem:[%s603 + $0x140] sm:$0xff]
    %v734 = vld [vmem:[%s603 + $0x240] sm:$0xff]
    %v735 = vld [vmem:[%s603 + $0x340] sm:$0xff]
    %v736 = vadd.f32 %v720, %v728
    %v737 = vadd.f32 %v721, %v729
    %v738 = vadd.f32 %v722, %v730
    %v739 = vadd.f32 %v723, %v731
    %v740 = vadd.f32 %v724, %v732
    %v741 = vadd.f32 %v725, %v733
    %v742 = vadd.f32 %v726, %v734
    %v743 = vadd.f32 %v727, %v735
    %v744 = vld [vmem:[%s598 + $0x48] sm:$0xff]
    %v745 = vld [vmem:[%s598 + $0x148] sm:$0xff]
    %v746 = vld [vmem:[%s598 + $0x248] sm:$0xff]
    %v747 = vld [vmem:[%s598 + $0x348] sm:$0xff]
    %v748 = vld [vmem:[%s603 + $0x48] sm:$0xff]
    %v749 = vld [vmem:[%s603 + $0x148] sm:$0xff]
    %v750 = vld [vmem:[%s603 + $0x248] sm:$0xff]
    %v751 = vld [vmem:[%s603 + $0x348] sm:$0xff]
    %v752 = vadd.f32 %v736, %v744
    %v753 = vadd.f32 %v737, %v745
    %v754 = vadd.f32 %v738, %v746
    %v755 = vadd.f32 %v739, %v747
    %v756 = vadd.f32 %v740, %v748
    %v757 = vadd.f32 %v741, %v749
    %v758 = vadd.f32 %v742, %v750
    %v759 = vadd.f32 %v743, %v751
    %v760 = vld [vmem:[%s598 + $0x50] sm:$0xff]
    %v761 = vld [vmem:[%s598 + $0x150] sm:$0xff]
    %v762 = vld [vmem:[%s598 + $0x250] sm:$0xff]
    %v763 = vld [vmem:[%s598 + $0x350] sm:$0xff]
    %v764 = vld [vmem:[%s603 + $0x50] sm:$0xff]
    %v765 = vld [vmem:[%s603 + $0x150] sm:$0xff]
    %v766 = vld [vmem:[%s603 + $0x250] sm:$0xff]
    %v767 = vld [vmem:[%s603 + $0x350] sm:$0xff]
    %v768 = vadd.f32 %v752, %v760
    %v769 = vadd.f32 %v753, %v761
    %v770 = vadd.f32 %v754, %v762
    %v771 = vadd.f32 %v755, %v763
    %v772 = vadd.f32 %v756, %v764
    %v773 = vadd.f32 %v757, %v765
    %v774 = vadd.f32 %v758, %v766
    %v775 = vadd.f32 %v759, %v767
    %v776 = vld [vmem:[%s598 + $0x58] sm:$0xff]
    %v777 = vld [vmem:[%s598 + $0x158] sm:$0xff]
    %v778 = vld [vmem:[%s598 + $0x258] sm:$0xff]
    %v779 = vld [vmem:[%s598 + $0x358] sm:$0xff]
    %v780 = vld [vmem:[%s603 + $0x58] sm:$0xff]
    %v781 = vld [vmem:[%s603 + $0x158] sm:$0xff]
    %v782 = vld [vmem:[%s603 + $0x258] sm:$0xff]
    %v783 = vld [vmem:[%s603 + $0x358] sm:$0xff]
    %v784 = vadd.f32 %v768, %v776
    %v785 = vadd.f32 %v769, %v777
    %v786 = vadd.f32 %v770, %v778
    %v787 = vadd.f32 %v771, %v779
    %v788 = vadd.f32 %v772, %v780
    %v789 = vadd.f32 %v773, %v781
    %v790 = vadd.f32 %v774, %v782
    %v791 = vadd.f32 %v775, %v783
    %v792 = vld [vmem:[%s598 + $0x60] sm:$0xff]
    %v793 = vld [vmem:[%s598 + $0x160] sm:$0xff]
    %v794 = vld [vmem:[%s598 + $0x260] sm:$0xff]
    %v795 = vld [vmem:[%s598 + $0x360] sm:$0xff]
    %v796 = vld [vmem:[%s603 + $0x60] sm:$0xff]
    %v797 = vld [vmem:[%s603 + $0x160] sm:$0xff]
    %v798 = vld [vmem:[%s603 + $0x260] sm:$0xff]
    %v799 = vld [vmem:[%s603 + $0x360] sm:$0xff]
    %v800 = vadd.f32 %v784, %v792
    %v801 = vadd.f32 %v785, %v793
    %v802 = vadd.f32 %v786, %v794
    %v803 = vadd.f32 %v787, %v795
    %v804 = vadd.f32 %v788, %v796
    %v805 = vadd.f32 %v789, %v797
    %v806 = vadd.f32 %v790, %v798
    %v807 = vadd.f32 %v791, %v799
    %v808 = vld [vmem:[%s598 + $0x68] sm:$0xff]
    %v809 = vld [vmem:[%s598 + $0x168] sm:$0xff]
    %v810 = vld [vmem:[%s598 + $0x268] sm:$0xff]
    %v811 = vld [vmem:[%s598 + $0x368] sm:$0xff]
    %v812 = vld [vmem:[%s603 + $0x68] sm:$0xff]
    %v813 = vld [vmem:[%s603 + $0x168] sm:$0xff]
    %v814 = vld [vmem:[%s603 + $0x268] sm:$0xff]
    %v815 = vld [vmem:[%s603 + $0x368] sm:$0xff]
    %v816 = vadd.f32 %v800, %v808
    %v817 = vadd.f32 %v801, %v809
    %v818 = vadd.f32 %v802, %v810
    %v819 = vadd.f32 %v803, %v811
    %v820 = vadd.f32 %v804, %v812
    %v821 = vadd.f32 %v805, %v813
    %v822 = vadd.f32 %v806, %v814
    %v823 = vadd.f32 %v807, %v815
    %v824 = vld [vmem:[%s598 + $0x70] sm:$0xff]
    %v825 = vld [vmem:[%s598 + $0x170] sm:$0xff]
    %v826 = vld [vmem:[%s598 + $0x270] sm:$0xff]
    %v827 = vld [vmem:[%s598 + $0x370] sm:$0xff]
    %v828 = vld [vmem:[%s603 + $0x70] sm:$0xff]
    %v829 = vld [vmem:[%s603 + $0x170] sm:$0xff]
    %v830 = vld [vmem:[%s603 + $0x270] sm:$0xff]
    %v831 = vld [vmem:[%s603 + $0x370] sm:$0xff]
    %v832 = vadd.f32 %v816, %v824
    %v833 = vadd.f32 %v817, %v825
    %v834 = vadd.f32 %v818, %v826
    %v835 = vadd.f32 %v819, %v827
    %v836 = vadd.f32 %v820, %v828
    %v837 = vadd.f32 %v821, %v829
    %v838 = vadd.f32 %v822, %v830
    %v839 = vadd.f32 %v823, %v831
    %v840 = vld [vmem:[%s598 + $0x78] sm:$0xff]
    %v841 = vld [vmem:[%s598 + $0x178] sm:$0xff]
    %v842 = vld [vmem:[%s598 + $0x278] sm:$0xff]
    %v843 = vld [vmem:[%s598 + $0x378] sm:$0xff]
    %v844 = vld [vmem:[%s603 + $0x78] sm:$0xff]
    %v845 = vld [vmem:[%s603 + $0x178] sm:$0xff]
    %v846 = vld [vmem:[%s603 + $0x278] sm:$0xff]
    %v847 = vld [vmem:[%s603 + $0x378] sm:$0xff]
    %v848 = vadd.f32 %v832, %v840
    %v849 = vadd.f32 %v833, %v841
    %v850 = vadd.f32 %v834, %v842
    %v851 = vadd.f32 %v835, %v843
    %v852 = vadd.f32 %v836, %v844
    %v853 = vadd.f32 %v837, %v845
    %v854 = vadd.f32 %v838, %v846
    %v855 = vadd.f32 %v839, %v847
    %v856 = vld [vmem:[%s598 + $0x80] sm:$0xff]
    %v857 = vld [vmem:[%s598 + $0x180] sm:$0xff]
    %v858 = vld [vmem:[%s598 + $0x280] sm:$0xff]
    %v859 = vld [vmem:[%s598 + $0x380] sm:$0xff]
    %v860 = vld [vmem:[%s603 + $0x80] sm:$0xff]
    %v861 = vld [vmem:[%s603 + $0x180] sm:$0xff]
    %v862 = vld [vmem:[%s603 + $0x280] sm:$0xff]
    %v863 = vld [vmem:[%s603 + $0x380] sm:$0xff]
    %v864 = vadd.f32 %v848, %v856
    %v865 = vadd.f32 %v849, %v857
    %v866 = vadd.f32 %v850, %v858
    %v867 = vadd.f32 %v851, %v859
    %v868 = vadd.f32 %v852, %v860
    %v869 = vadd.f32 %v853, %v861
    %v870 = vadd.f32 %v854, %v862
    %v871 = vadd.f32 %v855, %v863
    %v872 = vld [vmem:[%s598 + $0x88] sm:$0xff]
    %v873 = vld [vmem:[%s598 + $0x188] sm:$0xff]
    %v874 = vld [vmem:[%s598 + $0x288] sm:$0xff]
    %v875 = vld [vmem:[%s598 + $0x388] sm:$0xff]
    %v876 = vld [vmem:[%s603 + $0x88] sm:$0xff]
    %v877 = vld [vmem:[%s603 + $0x188] sm:$0xff]
    %v878 = vld [vmem:[%s603 + $0x288] sm:$0xff]
    %v879 = vld [vmem:[%s603 + $0x388] sm:$0xff]
    %v880 = vadd.f32 %v864, %v872
    %v881 = vadd.f32 %v865, %v873
    %v882 = vadd.f32 %v866, %v874
    %v883 = vadd.f32 %v867, %v875
    %v884 = vadd.f32 %v868, %v876
    %v885 = vadd.f32 %v869, %v877
    %v886 = vadd.f32 %v870, %v878
    %v887 = vadd.f32 %v871, %v879
    %v888 = vld [vmem:[%s598 + $0x90] sm:$0xff]
    %v889 = vld [vmem:[%s598 + $0x190] sm:$0xff]
    %v890 = vld [vmem:[%s598 + $0x290] sm:$0xff]
    %v891 = vld [vmem:[%s598 + $0x390] sm:$0xff]
    %v892 = vld [vmem:[%s603 + $0x90] sm:$0xff]
    %v893 = vld [vmem:[%s603 + $0x190] sm:$0xff]
    %v894 = vld [vmem:[%s603 + $0x290] sm:$0xff]
    %v895 = vld [vmem:[%s603 + $0x390] sm:$0xff]
    %v896 = vadd.f32 %v880, %v888
    %v897 = vadd.f32 %v881, %v889
    %v898 = vadd.f32 %v882, %v890
    %v899 = vadd.f32 %v883, %v891
    %v900 = vadd.f32 %v884, %v892
    %v901 = vadd.f32 %v885, %v893
    %v902 = vadd.f32 %v886, %v894
    %v903 = vadd.f32 %v887, %v895
    %v904 = vld [vmem:[%s598 + $0x98] sm:$0xff]
    %v905 = vld [vmem:[%s598 + $0x198] sm:$0xff]
    %v906 = vld [vmem:[%s598 + $0x298] sm:$0xff]
    %v907 = vld [vmem:[%s598 + $0x398] sm:$0xff]
    %v908 = vld [vmem:[%s603 + $0x98] sm:$0xff]
    %v909 = vld [vmem:[%s603 + $0x198] sm:$0xff]
    %v910 = vld [vmem:[%s603 + $0x298] sm:$0xff]
    %v911 = vld [vmem:[%s603 + $0x398] sm:$0xff]
    %v912 = vadd.f32 %v896, %v904
    %v913 = vadd.f32 %v897, %v905
    %v914 = vadd.f32 %v898, %v906
    %v915 = vadd.f32 %v899, %v907
    %v916 = vadd.f32 %v900, %v908
    %v917 = vadd.f32 %v901, %v909
    %v918 = vadd.f32 %v902, %v910
    %v919 = vadd.f32 %v903, %v911
    %v920 = vld [vmem:[%s598 + $0xa0] sm:$0xff]
    %v921 = vld [vmem:[%s598 + $0x1a0] sm:$0xff]
    %v922 = vld [vmem:[%s598 + $0x2a0] sm:$0xff]
    %v923 = vld [vmem:[%s598 + $0x3a0] sm:$0xff]
    %v924 = vld [vmem:[%s603 + $0xa0] sm:$0xff]
    %v925 = vld [vmem:[%s603 + $0x1a0] sm:$0xff]
    %v926 = vld [vmem:[%s603 + $0x2a0] sm:$0xff]
    %v927 = vld [vmem:[%s603 + $0x3a0] sm:$0xff]
    %v928 = vadd.f32 %v912, %v920
    %v929 = vadd.f32 %v913, %v921
    %v930 = vadd.f32 %v914, %v922
    %v931 = vadd.f32 %v915, %v923
    %v932 = vadd.f32 %v916, %v924
    %v933 = vadd.f32 %v917, %v925
    %v934 = vadd.f32 %v918, %v926
    %v935 = vadd.f32 %v919, %v927
    %v936 = vld [vmem:[%s598 + $0xa8] sm:$0xff]
    %v937 = vld [vmem:[%s598 + $0x1a8] sm:$0xff]
    %v938 = vld [vmem:[%s598 + $0x2a8] sm:$0xff]
    %v939 = vld [vmem:[%s598 + $0x3a8] sm:$0xff]
    %v940 = vld [vmem:[%s603 + $0xa8] sm:$0xff]
    %v941 = vld [vmem:[%s603 + $0x1a8] sm:$0xff]
    %v942 = vld [vmem:[%s603 + $0x2a8] sm:$0xff]
    %v943 = vld [vmem:[%s603 + $0x3a8] sm:$0xff]
    %v944 = vadd.f32 %v928, %v936
    %v945 = vadd.f32 %v929, %v937
    %v946 = vadd.f32 %v930, %v938
    %v947 = vadd.f32 %v931, %v939
    %v948 = vadd.f32 %v932, %v940
    %v949 = vadd.f32 %v933, %v941
    %v950 = vadd.f32 %v934, %v942
    %v951 = vadd.f32 %v935, %v943
    %v952 = vld [vmem:[%s598 + $0xb0] sm:$0xff]
    %v953 = vld [vmem:[%s598 + $0x1b0] sm:$0xff]
    %v954 = vld [vmem:[%s598 + $0x2b0] sm:$0xff]
    %v955 = vld [vmem:[%s598 + $0x3b0] sm:$0xff]
    %v956 = vld [vmem:[%s603 + $0xb0] sm:$0xff]
    %v957 = vld [vmem:[%s603 + $0x1b0] sm:$0xff]
    %v958 = vld [vmem:[%s603 + $0x2b0] sm:$0xff]
    %v959 = vld [vmem:[%s603 + $0x3b0] sm:$0xff]
    %v960 = vadd.f32 %v944, %v952
    %v961 = vadd.f32 %v945, %v953
    %v962 = vadd.f32 %v946, %v954
    %v963 = vadd.f32 %v947, %v955
    %v964 = vadd.f32 %v948, %v956
    %v965 = vadd.f32 %v949, %v957
    %v966 = vadd.f32 %v950, %v958
    %v967 = vadd.f32 %v951, %v959
    %v968 = vld [vmem:[%s598 + $0xb8] sm:$0xff]
    %v969 = vld [vmem:[%s598 + $0x1b8] sm:$0xff]
    %v970 = vld [vmem:[%s598 + $0x2b8] sm:$0xff]
    %v971 = vld [vmem:[%s598 + $0x3b8] sm:$0xff]
    %v972 = vld [vmem:[%s603 + $0xb8] sm:$0xff]
    %v973 = vld [vmem:[%s603 + $0x1b8] sm:$0xff]
    %v974 = vld [vmem:[%s603 + $0x2b8] sm:$0xff]
    %v975 = vld [vmem:[%s603 + $0x3b8] sm:$0xff]
    %v976 = vadd.f32 %v960, %v968
    %v977 = vadd.f32 %v961, %v969
    %v978 = vadd.f32 %v962, %v970
    %v979 = vadd.f32 %v963, %v971
    %v980 = vadd.f32 %v964, %v972
    %v981 = vadd.f32 %v965, %v973
    %v982 = vadd.f32 %v966, %v974
    %v983 = vadd.f32 %v967, %v975
    %v984 = vld [vmem:[%s598 + $0xc0] sm:$0xff]
    %v985 = vld [vmem:[%s598 + $0x1c0] sm:$0xff]
    %v986 = vld [vmem:[%s598 + $0x2c0] sm:$0xff]
    %v987 = vld [vmem:[%s598 + $0x3c0] sm:$0xff]
    %v988 = vld [vmem:[%s603 + $0xc0] sm:$0xff]
    %v989 = vld [vmem:[%s603 + $0x1c0] sm:$0xff]
    %v990 = vld [vmem:[%s603 + $0x2c0] sm:$0xff]
    %v991 = vld [vmem:[%s603 + $0x3c0] sm:$0xff]
    %v992 = vadd.f32 %v976, %v984
    %v993 = vadd.f32 %v977, %v985
    %v994 = vadd.f32 %v978, %v986
    %v995 = vadd.f32 %v979, %v987
    %v996 = vadd.f32 %v980, %v988
    %v997 = vadd.f32 %v981, %v989
    %v998 = vadd.f32 %v982, %v990
    %v999 = vadd.f32 %v983, %v991
    %v1000 = vld [vmem:[%s598 + $0xc8] sm:$0xff]
    %v1001 = vld [vmem:[%s598 + $0x1c8] sm:$0xff]
    %v1002 = vld [vmem:[%s598 + $0x2c8] sm:$0xff]
    %v1003 = vld [vmem:[%s598 + $0x3c8] sm:$0xff]
    %v1004 = vld [vmem:[%s603 + $0xc8] sm:$0xff]
    %v1005 = vld [vmem:[%s603 + $0x1c8] sm:$0xff]
    %v1006 = vld [vmem:[%s603 + $0x2c8] sm:$0xff]
    %v1007 = vld [vmem:[%s603 + $0x3c8] sm:$0xff]
    %v1008 = vadd.f32 %v992, %v1000
    %v1009 = vadd.f32 %v993, %v1001
    %v1010 = vadd.f32 %v994, %v1002
    %v1011 = vadd.f32 %v995, %v1003
    %v1012 = vadd.f32 %v996, %v1004
    %v1013 = vadd.f32 %v997, %v1005
    %v1014 = vadd.f32 %v998, %v1006
    %v1015 = vadd.f32 %v999, %v1007
    %v1016 = vld [vmem:[%s598 + $0xd0] sm:$0xff]
    %v1017 = vld [vmem:[%s598 + $0x1d0] sm:$0xff]
    %v1018 = vld [vmem:[%s598 + $0x2d0] sm:$0xff]
    %v1019 = vld [vmem:[%s598 + $0x3d0] sm:$0xff]
    %v1020 = vld [vmem:[%s603 + $0xd0] sm:$0xff]
    %v1021 = vld [vmem:[%s603 + $0x1d0] sm:$0xff]
    %v1022 = vld [vmem:[%s603 + $0x2d0] sm:$0xff]
    %v1023 = vld [vmem:[%s603 + $0x3d0] sm:$0xff]
    %v1024 = vadd.f32 %v1008, %v1016
    %v1025 = vadd.f32 %v1009, %v1017
    %v1026 = vadd.f32 %v1010, %v1018
    %v1027 = vadd.f32 %v1011, %v1019
    %v1028 = vadd.f32 %v1012, %v1020
    %v1029 = vadd.f32 %v1013, %v1021
    %v1030 = vadd.f32 %v1014, %v1022
    %v1031 = vadd.f32 %v1015, %v1023
    %v1032 = vld [vmem:[%s598 + $0xd8] sm:$0xff]
    %v1033 = vld [vmem:[%s598 + $0x1d8] sm:$0xff]
    %v1034 = vld [vmem:[%s598 + $0x2d8] sm:$0xff]
    %v1035 = vld [vmem:[%s598 + $0x3d8] sm:$0xff]
    %v1036 = vld [vmem:[%s603 + $0xd8] sm:$0xff]
    %v1037 = vld [vmem:[%s603 + $0x1d8] sm:$0xff]
    %v1038 = vld [vmem:[%s603 + $0x2d8] sm:$0xff]
    %v1039 = vld [vmem:[%s603 + $0x3d8] sm:$0xff]
    %v1040 = vadd.f32 %v1024, %v1032
    %v1041 = vadd.f32 %v1025, %v1033
    %v1042 = vadd.f32 %v1026, %v1034
    %v1043 = vadd.f32 %v1027, %v1035
    %v1044 = vadd.f32 %v1028, %v1036
    %v1045 = vadd.f32 %v1029, %v1037
    %v1046 = vadd.f32 %v1030, %v1038
    %v1047 = vadd.f32 %v1031, %v1039
    %v1048 = vld [vmem:[%s598 + $0xe0] sm:$0xff]
    %v1049 = vld [vmem:[%s598 + $0x1e0] sm:$0xff]
    %v1050 = vld [vmem:[%s598 + $0x2e0] sm:$0xff]
    %v1051 = vld [vmem:[%s598 + $0x3e0] sm:$0xff]
    %v1052 = vld [vmem:[%s603 + $0xe0] sm:$0xff]
    %v1053 = vld [vmem:[%s603 + $0x1e0] sm:$0xff]
    %v1054 = vld [vmem:[%s603 + $0x2e0] sm:$0xff]
    %v1055 = vld [vmem:[%s603 + $0x3e0] sm:$0xff]
    %v1056 = vadd.f32 %v1040, %v1048
    %v1057 = vadd.f32 %v1041, %v1049
    %v1058 = vadd.f32 %v1042, %v1050
    %v1059 = vadd.f32 %v1043, %v1051
    %v1060 = vadd.f32 %v1044, %v1052
    %v1061 = vadd.f32 %v1045, %v1053
    %v1062 = vadd.f32 %v1046, %v1054
    %v1063 = vadd.f32 %v1047, %v1055
    %v1064 = vld [vmem:[%s598 + $0xe8] sm:$0xff]
    %v1065 = vld [vmem:[%s598 + $0x1e8] sm:$0xff]
    %v1066 = vld [vmem:[%s598 + $0x2e8] sm:$0xff]
    %v1067 = vld [vmem:[%s598 + $0x3e8] sm:$0xff]
    %v1068 = vld [vmem:[%s603 + $0xe8] sm:$0xff]
    %v1069 = vld [vmem:[%s603 + $0x1e8] sm:$0xff]
    %v1070 = vld [vmem:[%s603 + $0x2e8] sm:$0xff]
    %v1071 = vld [vmem:[%s603 + $0x3e8] sm:$0xff]
    %v1072 = vadd.f32 %v1056, %v1064
    %v1073 = vadd.f32 %v1057, %v1065
    %v1074 = vadd.f32 %v1058, %v1066
    %v1075 = vadd.f32 %v1059, %v1067
    %v1076 = vadd.f32 %v1060, %v1068
    %v1077 = vadd.f32 %v1061, %v1069
    %v1078 = vadd.f32 %v1062, %v1070
    %v1079 = vadd.f32 %v1063, %v1071
    %v1080 = vld [vmem:[%s598 + $0xf0] sm:$0xff]
    %v1081 = vld [vmem:[%s598 + $0x1f0] sm:$0xff]
    %v1082 = vld [vmem:[%s598 + $0x2f0] sm:$0xff]
    %v1083 = vld [vmem:[%s598 + $0x3f0] sm:$0xff]
    %v1084 = vld [vmem:[%s603 + $0xf0] sm:$0xff]
    %v1085 = vld [vmem:[%s603 + $0x1f0] sm:$0xff]
    %v1086 = vld [vmem:[%s603 + $0x2f0] sm:$0xff]
    %v1087 = vld [vmem:[%s603 + $0x3f0] sm:$0xff]
    %v1088 = vadd.f32 %v1072, %v1080
    %v1089 = vadd.f32 %v1073, %v1081
    %v1090 = vadd.f32 %v1074, %v1082
    %v1091 = vadd.f32 %v1075, %v1083
    %v1092 = vadd.f32 %v1076, %v1084
    %v1093 = vadd.f32 %v1077, %v1085
    %v1094 = vadd.f32 %v1078, %v1086
    %v1095 = vadd.f32 %v1079, %v1087
    %v1096 = vld [vmem:[%s598 + $0xf8] sm:$0xff]
    %v1097 = vld [vmem:[%s598 + $0x1f8] sm:$0xff]
    %v1098 = vld [vmem:[%s598 + $0x2f8] sm:$0xff]
    %v1099 = vld [vmem:[%s598 + $0x3f8] sm:$0xff]
    %v1100 = vld [vmem:[%s603 + $0xf8] sm:$0xff]
    %v1101 = vld [vmem:[%s603 + $0x1f8] sm:$0xff]
    %v1102 = vld [vmem:[%s603 + $0x2f8] sm:$0xff]
    %v1103 = vld [vmem:[%s603 + $0x3f8] sm:$0xff]
    %v1104 = vadd.f32 %v1088, %v1096
    %v1105 = vadd.f32 %v1089, %v1097
    %v1106 = vadd.f32 %v1090, %v1098
    %v1107 = vadd.f32 %v1091, %v1099
    %v1108 = vadd.f32 %v1092, %v1100
    %v1109 = vadd.f32 %v1093, %v1101
    %v1110 = vadd.f32 %v1094, %v1102
    %v1111 = vadd.f32 %v1095, %v1103
    %1112 = vst [vmem:[%s588] sm:$0xff] %v1104
    %1113 = vst [vmem:[%s588 + $0x8] sm:$0xff] %v1105
    %1114 = vst [vmem:[%s588 + $0x10] sm:$0xff] %v1106
    %1115 = vst [vmem:[%s588 + $0x18] sm:$0xff] %v1107
    %1116 = vst [vmem:[%s593] sm:$0xff] %v1108
    %1117 = vst [vmem:[%s593 + $0x8] sm:$0xff] %v1109
    %1118 = vst [vmem:[%s593 + $0x10] sm:$0xff] %v1110
    %1119 = vst [vmem:[%s593 + $0x18] sm:$0xff] %v1111
    // Predicated region
    $region22: #{tpu_custom_call.1} parent=1 // pred_check
      %p1120 = pneg %p40
    $region23: #{tpu_custom_call.1} parent=1 // pred_check_branch
      %1122 = sbr.rel (%p1120) target = $region25
    $region24: #{tpu_custom_call.1} parent=1 // pred_region
      %v1123 = vld [vmem:[#allocation2] sm:$0xff]
      %v1124 = vld [vmem:[#allocation2 + $0x8] sm:$0xff]
      %v1125 = vld [vmem:[#allocation2 + $0x10] sm:$0xff]
      %v1126 = vld [vmem:[#allocation2 + $0x18] sm:$0xff]
      %1127 = vadd.xlane.f32.xlu0 %v1123
      %v1128 = vpop.xlane.xlu0 %1127
      %1129 = vadd.xlane.f32.xlu0 %v1124
      %v1130 = vpop.xlane.xlu0 %1129
      %1131 = vadd.xlane.f32.xlu0 %v1125
      %v1132 = vpop.xlane.xlu0 %1131
      %1133 = vadd.xlane.f32.xlu0 %v1126
      %v1134 = vpop.xlane.xlu0 %1133
      %v1139 = vlaneseq
      %v1140 = vand.u32 %v1139, 127
      %v1141 = vlaneseq
      %v1142 = vshrl.u32 %v1141, 7
      %v1143 = vsub.s32 %v1140, %v1142
      %v1144 = vrot.slane %v1128, %v1143
      %v1145 = vadd.s32 %v1140, 4294967288
      %v1146 = vlaneseq
      %v1147 = vshrl.u32 %v1146, 7
      %v1148 = vsub.s32 %v1145, %v1147
      %v1149 = vrot.slane %v1130, %v1148
      %vm1150 = vcmask 130112
      %v1151 = vsel %vm1150, %v1149, %v1144
      %v1152 = vadd.s32 %v1140, 4294967280
      %v1153 = vlaneseq
      %v1154 = vshrl.u32 %v1153, 7
      %v1155 = vsub.s32 %v1152, %v1154
      %v1156 = vrot.slane %v1132, %v1155
      %vm1157 = vcmask 195712
      %v1158 = vsel %vm1157, %v1156, %v1151
      %v1159 = vadd.s32 %v1140, 4294967272
      %v1160 = vlaneseq
      %v1161 = vshrl.u32 %v1160, 7
      %v1162 = vsub.s32 %v1159, %v1161
      %v1163 = vrot.slane %v1134, %v1162
      %vm1164 = vcmask 261312
      %v1165 = vsel %vm1164, %v1163, %v1158
      %vm1167 = vcmask 253952
      %1168 = vst.msk [vmem:[#allocation9] sm:$0x1] %vm1167, %v1165
      %v1169 = vld [vmem:[#allocation3] sm:$0xff]
      %v1170 = vld [vmem:[#allocation3 + $0x8] sm:$0xff]
      %v1171 = vld [vmem:[#allocation3 + $0x10] sm:$0xff]
      %v1172 = vld [vmem:[#allocation3 + $0x18] sm:$0xff]
      %1173 = vadd.xlane.f32.xlu0 %v1169
      %v1174 = vpop.xlane.xlu0 %1173
      %1175 = vadd.xlane.f32.xlu0 %v1170
      %v1176 = vpop.xlane.xlu0 %1175
      %1177 = vadd.xlane.f32.xlu0 %v1171
      %v1178 = vpop.xlane.xlu0 %1177
      %1179 = vadd.xlane.f32.xlu0 %v1172
      %v1180 = vpop.xlane.xlu0 %1179
      %v1185 = vlaneseq
      %v1186 = vshrl.u32 %v1185, 7
      %v1187 = vsub.s32 %v1140, %v1186
      %v1188 = vrot.slane %v1174, %v1187
      %v1189 = vlaneseq
      %v1190 = vshrl.u32 %v1189, 7
      %v1191 = vsub.s32 %v1145, %v1190
      %v1192 = vrot.slane %v1176, %v1191
      %v1193 = vsel %vm1150, %v1192, %v1188
      %v1194 = vlaneseq
      %v1195 = vshrl.u32 %v1194, 7
      %v1196 = vsub.s32 %v1152, %v1195
      %v1197 = vrot.slane %v1178, %v1196
      %v1198 = vsel %vm1157, %v1197, %v1193
      %v1199 = vlaneseq
      %v1200 = vshrl.u32 %v1199, 7
      %v1201 = vsub.s32 %v1159, %v1200
      %v1202 = vrot.slane %v1180, %v1201
      %v1203 = vsel %vm1164, %v1202, %v1198
      %1205 = vst.msk [vmem:[#allocation9 + $0x1] sm:$0x1] %vm1167, %v1203
      %v1206 = vld [vmem:[%s588] sm:$0xff]
      %v1207 = vld [vmem:[%s588 + $0x8] sm:$0xff]
      %v1208 = vld [vmem:[%s588 + $0x10] sm:$0xff]
      %v1209 = vld [vmem:[%s588 + $0x18] sm:$0xff]
      %1210 = vadd.xlane.f32.xlu0 %v1206
      %v1211 = vpop.xlane.xlu0 %1210
      %1212 = vadd.xlane.f32.xlu0 %v1207
      %v1213 = vpop.xlane.xlu0 %1212
      %1214 = vadd.xlane.f32.xlu0 %v1208
      %v1215 = vpop.xlane.xlu0 %1214
      %1216 = vadd.xlane.f32.xlu0 %v1209
      %v1217 = vpop.xlane.xlu0 %1216
      %v1222 = vlaneseq
      %v1223 = vshrl.u32 %v1222, 7
      %v1224 = vsub.s32 %v1140, %v1223
      %v1225 = vrot.slane %v1211, %v1224
      %v1226 = vlaneseq
      %v1227 = vshrl.u32 %v1226, 7
      %v1228 = vsub.s32 %v1145, %v1227
      %v1229 = vrot.slane %v1213, %v1228
      %v1230 = vsel %vm1150, %v1229, %v1225
      %v1231 = vlaneseq
      %v1232 = vshrl.u32 %v1231, 7
      %v1233 = vsub.s32 %v1152, %v1232
      %v1234 = vrot.slane %v1215, %v1233
      %v1235 = vsel %vm1157, %v1234, %v1230
      %v1236 = vlaneseq
      %v1237 = vshrl.u32 %v1236, 7
      %v1238 = vsub.s32 %v1159, %v1237
      %v1239 = vrot.slane %v1217, %v1238
      %v1240 = vsel %vm1164, %v1239, %v1235
      %s1242 = scalar_lea.vmem [#allocation9], 2
      %1243 = vst.msk [vmem:[%s1242] sm:$0x1] %vm1167, %v1240
      %v1244 = vld [vmem:[%s593] sm:$0xff]
      %v1245 = vld [vmem:[%s593 + $0x8] sm:$0xff]
      %v1246 = vld [vmem:[%s593 + $0x10] sm:$0xff]
      %v1247 = vld [vmem:[%s593 + $0x18] sm:$0xff]
      %1248 = vadd.xlane.f32.xlu0 %v1244
      %v1249 = vpop.xlane.xlu0 %1248
      %1250 = vadd.xlane.f32.xlu0 %v1245
      %v1251 = vpop.xlane.xlu0 %1250
      %1252 = vadd.xlane.f32.xlu0 %v1246
      %v1253 = vpop.xlane.xlu0 %1252
      %1254 = vadd.xlane.f32.xlu0 %v1247
      %v1255 = vpop.xlane.xlu0 %1254
      %v1260 = vlaneseq
      %v1261 = vshrl.u32 %v1260, 7
      %v1262 = vsub.s32 %v1140, %v1261
      %v1263 = vrot.slane %v1249, %v1262
      %v1264 = vlaneseq
      %v1265 = vshrl.u32 %v1264, 7
      %v1266 = vsub.s32 %v1145, %v1265
      %v1267 = vrot.slane %v1251, %v1266
      %v1268 = vsel %vm1150, %v1267, %v1263
      %v1269 = vlaneseq
      %v1270 = vshrl.u32 %v1269, 7
      %v1271 = vsub.s32 %v1152, %v1270
      %v1272 = vrot.slane %v1253, %v1271
      %v1273 = vsel %vm1157, %v1272, %v1268
      %v1274 = vlaneseq
      %v1275 = vshrl.u32 %v1274, 7
      %v1276 = vsub.s32 %v1159, %v1275
      %v1277 = vrot.slane %v1255, %v1276
      %v1278 = vsel %vm1164, %v1277, %v1273
      %1280 = vst.msk [vmem:[%s1242 + $0x1] sm:$0x1] %vm1167, %v1278
    $region25: #{tpu_custom_call.1} parent=1 // pred_fallthru
      _
    // Predicated region
    $region26: #{tpu_custom_call.1} parent=1 // pred_check
      _
    $region27: #{tpu_custom_call.1} parent=1 // pred_check_branch
      %1282 = sbr.rel (0) target = $region29
    $region28: #{tpu_custom_call.1} parent=1 // pred_region
      %s1284 = ssub.s32 64, 64
      %1285 = vsyncadd [#allocation6], %s1284
      %s1286 = sshll.u32 [#allocation9], 4
      %s1287 = int_to_ptr.vmem [resolvable:$true] %s1286
      %1292 = dma.vmem_to_hbm [thread:$0]  %s1287, 64, %s2, [#allocation6], 32, 32, 2
    $region29: #{tpu_custom_call.1} parent=1 // pred_fallthru
      _
    // Predicated region
    $region30: #{tpu_custom_call.1} parent=1 // pred_check
      _
    $region31: #{tpu_custom_call.1} parent=1 // pred_check_branch
      %1294 = sbr.rel (0) target = $region33
    $region32: #{tpu_custom_call.1} parent=1 // pred_region
      %1295 = dma.done [#allocation6], 64
    $region33: #{tpu_custom_call.1} parent=1 // pred_fallthru
      _
    %1296 = vsyncpa [#allocation5], 1
    %1297 = vsyncpa [#allocation8], 1
    %1298 = vsyncpa [#allocation6], 1

</llo_original>
